<compile_context>
chip_gen: v7x
topology: tpu7x:2x2x1
jax: 0.10.0
libtpu: 0.0.40
codegen_flags: <defaults>
</compile_context>

<pallas_src>
import math
import functools

import jax
import jax.numpy as jnp
import numpy as np
from jax.experimental import pallas as pl
from jax.experimental.pallas import tpu as pltpu

# ----------------------------- configuration --------------------------------
N_NODES = 8
IN_DIM = 32
OUT_DIM = 32
N_HEADS = 4
D_K = OUT_DIM // N_HEADS
# is_quant=False, use_norm=False, dropout never applied in forward()


# ------------------------------ Pallas kernel -------------------------------
def hgt_kernel(
    h_ref,       # [N, in_dim]
    adj_ref,     # [N_dst, N_src] float (0/1)
    wproj_ref,   # [3, H, in_dim, d_k]   (k_fused, v_fused, q) split per head
    bproj_ref,   # [3, H, 1, d_k]
    wa_ref,      # [H, d_k, out_dim]     a_linear weight split per head
    ba_ref,      # [1, out_dim]
    o_ref,       # [N, out_dim]
    *, n_heads: int, scale: float,
):
    h = h_ref[...]                                   # [N, Din]
    adj = adj_ref[...]                               # [N, N]
    n, din = h.shape

    # Head-batched projections: weights were pre-split per head host-side, so
    # no in-kernel reshape/transpose of activations is required.
    hb = jnp.broadcast_to(h, (n_heads, n, din))      # [H, N, Din]

    def proj(idx):                                   # static idx -> [H, N, d_k]
        return (jnp.einsum("hnd,hdf->hnf", hb, wproj_ref[idx],
                           preferred_element_type=jnp.float32)
                + bproj_ref[idx])

    k = proj(0)                                      # (k_linear ∘ attn_linear)
    v = proj(1)                                      # (v_linear ∘ msg_linear)
    q = proj(2)                                      # q_linear

    # Masked per-head attention scores (additive mask computed once).
    bias = jnp.where(adj > 0.0, 0.0, -1e30)          # [N, N]
    s = jnp.einsum("hnd,hmd->hnm", q, k,
                   preferred_element_type=jnp.float32) * scale
    s = s + bias[None, :, :]                         # [H, N_dst, N_src]

    # edge_softmax grouped by destination node (last axis = incoming edges).
    m = jnp.max(s, axis=-1, keepdims=True)
    p = jnp.exp(s - m)                               # masked entries underflow to 0
    den = jnp.sum(p, axis=-1, keepdims=True)         # >= 1 (max entry contributes 1)
    attn = p * pl.reciprocal(den, approx=True)

    # u_mul_e_sum: aggregate neighbor messages per head.
    aggh = jnp.einsum("hnm,hmd->hnd", attn, v,
                      preferred_element_type=jnp.float32)   # [H, N, d_k]

    # a_linear folded per head; summing over heads recombines the head concat.
    outh = jnp.einsum("hnd,hdo->hno", aggh, wa_ref[...],
                      preferred_element_type=jnp.float32)   # [H, N, Dout]
    out = jnp.sum(outh, axis=0)                             # [N, Dout]

    # Destination nodes without in-edges aggregate to 0 before a_linear bias.
    deg = jnp.sum(adj, axis=-1, keepdims=True)       # [N, 1]
    out = jnp.where(deg > 0.0, out, 0.0) + ba_ref[...]
    o_ref[...] = out.astype(o_ref.dtype)


@jax.jit
def hgt_forward(h, adj, params):
    n = h.shape[0]
    H, Dk = N_HEADS, D_K

    # Fold the chained linear layers at trace time (pure linear composition).
    wk = params["Wk"] @ params["Wattn"]
    bk = params["bk"] @ params["Wattn"] + params["battn"]
    wv = params["Wv"] @ params["Wmsg"]
    bv = params["bv"] @ params["Wmsg"] + params["bmsg"]
    wq, bq = params["Wq"], params["bq"]

    def w_heads(w):   # [Din, H*Dk] -> [H, Din, Dk]
        return jnp.transpose(w.reshape(IN_DIM, H, Dk), (1, 0, 2))

    def b_heads(b):   # [1, H*Dk] -> [H, 1, Dk]
        return jnp.transpose(b.reshape(1, H, Dk), (1, 0, 2))

    # Pack operands into slabs: 6 kernel inputs instead of 16.
    wproj = jnp.stack([w_heads(wk), w_heads(wv), w_heads(wq)])   # [3, H, Din, Dk]
    bproj = jnp.stack([b_heads(bk), b_heads(bv), b_heads(bq)])   # [3, H, 1, Dk]
    wa = params["Wa"].reshape(H, Dk, OUT_DIM)                    # [H, Dk, Dout]
    ba = params["ba"]                                            # [1, Dout]

    kernel = functools.partial(hgt_kernel, n_heads=H, scale=1.0 / math.sqrt(Dk))
    args = (h, adj, wproj, bproj, wa, ba)
    return pl.pallas_call(
        kernel,
        out_shape=jax.ShapeDtypeStruct((n, OUT_DIM), jnp.float32),
        in_specs=[pl.BlockSpec(memory_space=pltpu.MemorySpace.VMEM)] * len(args),
        out_specs=pl.BlockSpec(memory_space=pltpu.MemorySpace.VMEM),
    )(*args)


# --------------------------- plain-JAX reference -----------------------------
def hgt_reference(h, adj, params):
    def lin(x, w, b):
        return x @ w + b

    k = lin(lin(h, params["Wk"], params["bk"]), params["Wattn"], params["battn"])
    v = lin(lin(h, params["Wv"], params["bv"]), params["Wmsg"], params["bmsg"])
    q = lin(h, params["Wq"], params["bq"])

    n = h.shape[0]
    kh = k.reshape(n, N_HEADS, D_K)
    vh = v.reshape(n, N_HEADS, D_K)
    qh = q.reshape(n, N_HEADS, D_K)

    # scores[head, dst, src]
    s = jnp.einsum("dhf,shf->hds", qh, kh) / math.sqrt(D_K)
    edge = (adj > 0.0)[None, :, :]
    s = jnp.where(edge, s, -1e30)
    m = jnp.max(s, axis=-1, keepdims=True)
    p = jnp.where(edge, jnp.exp(s - m), 0.0)
    den = jnp.sum(p, axis=-1, keepdims=True)
    attn = p * jnp.where(den > 0.0, 1.0 / den, 0.0)

    agg = jnp.einsum("hds,shf->dhf", attn, vh).reshape(n, OUT_DIM)
    return agg @ params["Wa"] + params["ba"]


# ------------------------------- parameters ----------------------------------
def make_linear(key, fan_in, fan_out):
    kw, kb = jax.random.split(key)
    bound = 1.0 / math.sqrt(fan_in)
    w = jax.random.uniform(kw, (fan_in, fan_out), jnp.float32, -bound, bound)
    b = jax.random.uniform(kb, (1, fan_out), jnp.float32, -bound, bound)
    return w, b


def init_params(key):
    keys = jax.random.split(key, 6)
    p = {}
    p["Wq"], p["bq"] = make_linear(keys[0], IN_DIM, OUT_DIM)
    p["Wk"], p["bk"] = make_linear(keys[1], IN_DIM, OUT_DIM)
    p["Wv"], p["bv"] = make_linear(keys[2], IN_DIM, OUT_DIM)
    p["Wmsg"], p["bmsg"] = make_linear(keys[3], OUT_DIM, OUT_DIM)
    p["Wattn"], p["battn"] = make_linear(keys[4], OUT_DIM, OUT_DIM)
    p["Wa"], p["ba"] = make_linear(keys[5], OUT_DIM, OUT_DIM)
    return p


if __name__ == "__main__":
    root = jax.random.PRNGKey(0)
    k_h, k_adj, k_params = jax.random.split(root, 3)

    # Node features.
    h = jax.random.normal(k_h, (N_NODES, IN_DIM), jnp.float32)

    # Deterministic small graph: random edges + self-loops (adj[dst, src]).
    rand_edges = (jax.random.uniform(k_adj, (N_NODES, N_NODES)) < 0.4)
    adj = jnp.maximum(rand_edges.astype(jnp.float32), jnp.eye(N_NODES, dtype=jnp.float32))

    params = init_params(k_params)

    out = hgt_forward(h, adj, params)
    out = jax.block_until_ready(out)

    ref = hgt_reference(h, adj, params)
    np.testing.assert_allclose(np.asarray(out), np.asarray(ref), rtol=2e-2, atol=2e-2)

    print("KERNEL_OK")
</pallas_src>

<mosaic_0001>
module attributes {stable_mosaic.version = 11 : i64} {
  func.func @hgt_kernel(%arg0: memref<8x32xf32, #tpu.memory_space<vmem>>, %arg1: memref<8x8xf32, #tpu.memory_space<vmem>>, %arg2: memref<3x4x32x8xf32, #tpu.memory_space<vmem>>, %arg3: memref<3x4x1x8xf32, #tpu.memory_space<vmem>>, %arg4: memref<4x8x32xf32, #tpu.memory_space<vmem>>, %arg5: memref<1x32xf32, #tpu.memory_space<vmem>>, %arg6: memref<8x32xf32, #tpu.memory_space<vmem>>) attributes {dimension_semantics = [], scalar_prefetch = 0 : i64, scratch_operands = 0 : i64, tpu.core_type = #tpu.core_type<tc>} {
    %c0 = arith.constant 0 : index
    %c0_0 = arith.constant 0 : index
    %0 = vector.load %arg0[%c0, %c0_0] : memref<8x32xf32, #tpu.memory_space<vmem>>, vector<8x32xf32>
    %c0_1 = arith.constant 0 : index
    %c0_2 = arith.constant 0 : index
    %1 = vector.load %arg1[%c0_1, %c0_2] : memref<8x8xf32, #tpu.memory_space<vmem>>, vector<8x8xf32>
    %2 = vector.shape_cast %0 : vector<8x32xf32> to vector<1x8x32xf32>
    %3 = vector.broadcast %2 : vector<1x8x32xf32> to vector<4x8x32xf32>
    %c0_3 = arith.constant 0 : index
    %c0_4 = arith.constant 0 : index
    %c0_5 = arith.constant 0 : index
    %c0_6 = arith.constant 0 : index
    %4 = vector.load %arg2[%c0_3, %c0_4, %c0_5, %c0_6] : memref<3x4x32x8xf32, #tpu.memory_space<vmem>>, vector<1x4x32x8xf32>
    %5 = vector.shape_cast %4 : vector<1x4x32x8xf32> to vector<4x32x8xf32>
    "tpu.trace_start"() <{level = 10 : i32, message = "hnd,hdf->hnf"}> : () -> ()
    %cst = arith.constant dense<0.000000e+00> : vector<4x8x8xf32>
    %6 = tpu.matmul %3, %5, %cst {dimension_numbers = #tpu.dot_dimension_numbers<[2], [1], [1], [2], [0, 0, 0, 1, 1, 2], [0], [0]>} : vector<4x8x32xf32>, vector<4x32x8xf32>, vector<4x8x8xf32> -> vector<4x8x8xf32>
    "tpu.trace_stop"() : () -> ()
    %c0_7 = arith.constant 0 : index
    %c0_8 = arith.constant 0 : index
    %c0_9 = arith.constant 0 : index
    %c0_10 = arith.constant 0 : index
    %7 = vector.load %arg3[%c0_7, %c0_8, %c0_9, %c0_10] : memref<3x4x1x8xf32, #tpu.memory_space<vmem>>, vector<1x4x1x8xf32>
    %8 = vector.shape_cast %7 : vector<1x4x1x8xf32> to vector<4x1x8xf32>
    %9 = vector.broadcast %8 : vector<4x1x8xf32> to vector<4x8x8xf32>
    %10 = arith.addf %6, %9 : vector<4x8x8xf32>
    %c1 = arith.constant 1 : index
    %c0_11 = arith.constant 0 : index
    %c0_12 = arith.constant 0 : index
    %c0_13 = arith.constant 0 : index
    %11 = vector.load %arg2[%c1, %c0_11, %c0_12, %c0_13] : memref<3x4x32x8xf32, #tpu.memory_space<vmem>>, vector<1x4x32x8xf32>
    %12 = vector.shape_cast %11 : vector<1x4x32x8xf32> to vector<4x32x8xf32>
    "tpu.trace_start"() <{level = 10 : i32, message = "hnd,hdf->hnf"}> : () -> ()
    %cst_14 = arith.constant dense<0.000000e+00> : vector<4x8x8xf32>
    %13 = tpu.matmul %3, %12, %cst_14 {dimension_numbers = #tpu.dot_dimension_numbers<[2], [1], [1], [2], [0, 0, 0, 1, 1, 2], [0], [0]>} : vector<4x8x32xf32>, vector<4x32x8xf32>, vector<4x8x8xf32> -> vector<4x8x8xf32>
    "tpu.trace_stop"() : () -> ()
    %c1_15 = arith.constant 1 : index
    %c0_16 = arith.constant 0 : index
    %c0_17 = arith.constant 0 : index
    %c0_18 = arith.constant 0 : index
    %14 = vector.load %arg3[%c1_15, %c0_16, %c0_17, %c0_18] : memref<3x4x1x8xf32, #tpu.memory_space<vmem>>, vector<1x4x1x8xf32>
    %15 = vector.shape_cast %14 : vector<1x4x1x8xf32> to vector<4x1x8xf32>
    %16 = vector.broadcast %15 : vector<4x1x8xf32> to vector<4x8x8xf32>
    %17 = arith.addf %13, %16 : vector<4x8x8xf32>
    %c2 = arith.constant 2 : index
    %c0_19 = arith.constant 0 : index
    %c0_20 = arith.constant 0 : index
    %c0_21 = arith.constant 0 : index
    %18 = vector.load %arg2[%c2, %c0_19, %c0_20, %c0_21] : memref<3x4x32x8xf32, #tpu.memory_space<vmem>>, vector<1x4x32x8xf32>
    %19 = vector.shape_cast %18 : vector<1x4x32x8xf32> to vector<4x32x8xf32>
    "tpu.trace_start"() <{level = 10 : i32, message = "hnd,hdf->hnf"}> : () -> ()
    %cst_22 = arith.constant dense<0.000000e+00> : vector<4x8x8xf32>
    %20 = tpu.matmul %3, %19, %cst_22 {dimension_numbers = #tpu.dot_dimension_numbers<[2], [1], [1], [2], [0, 0, 0, 1, 1, 2], [0], [0]>} : vector<4x8x32xf32>, vector<4x32x8xf32>, vector<4x8x8xf32> -> vector<4x8x8xf32>
    "tpu.trace_stop"() : () -> ()
    %c2_23 = arith.constant 2 : index
    %c0_24 = arith.constant 0 : index
    %c0_25 = arith.constant 0 : index
    %c0_26 = arith.constant 0 : index
    %21 = vector.load %arg3[%c2_23, %c0_24, %c0_25, %c0_26] : memref<3x4x1x8xf32, #tpu.memory_space<vmem>>, vector<1x4x1x8xf32>
    %22 = vector.shape_cast %21 : vector<1x4x1x8xf32> to vector<4x1x8xf32>
    %23 = vector.broadcast %22 : vector<4x1x8xf32> to vector<4x8x8xf32>
    %24 = arith.addf %20, %23 : vector<4x8x8xf32>
    %cst_27 = arith.constant 0.000000e+00 : f32
    %25 = vector.broadcast %cst_27 : f32 to vector<8x8xf32>
    %26 = arith.cmpf ogt, %1, %25 : vector<8x8xf32>
    %cst_28 = arith.constant 0.000000e+00 : f32
    %cst_29 = arith.constant -1.000000e+30 : f32
    %27 = vector.broadcast %cst_28 : f32 to vector<8x8xf32>
    %28 = vector.broadcast %cst_29 : f32 to vector<8x8xf32>
    %29 = arith.select %26, %27, %28 : vector<8x8xi1>, vector<8x8xf32>
    "tpu.trace_start"() <{level = 10 : i32, message = "hnd,hmd->hnm"}> : () -> ()
    %cst_30 = arith.constant dense<0.000000e+00> : vector<4x8x8xf32>
    %30 = tpu.matmul %24, %10, %cst_30 {dimension_numbers = #tpu.dot_dimension_numbers<[2], [2], [1], [1], [0, 0, 0, 1, 1, 1], [0], [0]>} : vector<4x8x8xf32>, vector<4x8x8xf32>, vector<4x8x8xf32> -> vector<4x8x8xf32>
    "tpu.trace_stop"() : () -> ()
    %cst_31 = arith.constant 0.353553385 : f32
    %31 = vector.broadcast %cst_31 : f32 to vector<4x8x8xf32>
    %32 = arith.mulf %30, %31 : vector<4x8x8xf32>
    %33 = vector.shape_cast %29 : vector<8x8xf32> to vector<1x8x8xf32>
    %34 = vector.broadcast %33 : vector<1x8x8xf32> to vector<4x8x8xf32>
    %35 = arith.addf %32, %34 : vector<4x8x8xf32>
    %cst_32 = arith.constant dense<0xFF800000> : vector<4x8xf32>
    %36 = vector.multi_reduction <maximumf>, %35, %cst_32 [2] : vector<4x8x8xf32> to vector<4x8xf32>
    %37 = vector.shape_cast %36 : vector<4x8xf32> to vector<4x8x1xf32>
    %38 = vector.broadcast %37 : vector<4x8x1xf32> to vector<4x8x8xf32>
    %39 = arith.subf %35, %38 : vector<4x8x8xf32>
    %40 = math.exp %39 : vector<4x8x8xf32>
    %cst_33 = arith.constant dense<0.000000e+00> : vector<4x8xf32>
    %41 = vector.multi_reduction <add>, %40, %cst_33 [2] : vector<4x8x8xf32> to vector<4x8xf32>
    %42 = vector.shape_cast %41 : vector<4x8xf32> to vector<4x8x1xf32>
    %43 = tpu.reciprocal %42 {approx = true} : vector<4x8x1xf32> -> vector<4x8x1xf32>
    %44 = vector.broadcast %43 : vector<4x8x1xf32> to vector<4x8x8xf32>
    %45 = arith.mulf %40, %44 : vector<4x8x8xf32>
    "tpu.trace_start"() <{level = 10 : i32, message = "hnm,hmd->hnd"}> : () -> ()
    %cst_34 = arith.constant dense<0.000000e+00> : vector<4x8x8xf32>
    %46 = tpu.matmul %45, %17, %cst_34 {dimension_numbers = #tpu.dot_dimension_numbers<[2], [1], [1], [2], [0, 0, 0, 1, 1, 2], [0], [0]>} : vector<4x8x8xf32>, vector<4x8x8xf32>, vector<4x8x8xf32> -> vector<4x8x8xf32>
    "tpu.trace_stop"() : () -> ()
    %c0_35 = arith.constant 0 : index
    %c0_36 = arith.constant 0 : index
    %c0_37 = arith.constant 0 : index
    %47 = vector.load %arg4[%c0_35, %c0_36, %c0_37] : memref<4x8x32xf32, #tpu.memory_space<vmem>>, vector<4x8x32xf32>
    "tpu.trace_start"() <{level = 10 : i32, message = "hnd,hdo->hno"}> : () -> ()
    %cst_38 = arith.constant dense<0.000000e+00> : vector<4x8x32xf32>
    %48 = tpu.matmul %46, %47, %cst_38 {dimension_numbers = #tpu.dot_dimension_numbers<[2], [1], [1], [2], [0, 0, 0, 1, 1, 2], [0], [0]>} : vector<4x8x8xf32>, vector<4x8x32xf32>, vector<4x8x32xf32> -> vector<4x8x32xf32>
    "tpu.trace_stop"() : () -> ()
    %cst_39 = arith.constant dense<0.000000e+00> : vector<8x32xf32>
    %49 = vector.multi_reduction <add>, %48, %cst_39 [0] : vector<4x8x32xf32> to vector<8x32xf32>
    %cst_40 = arith.constant dense<0.000000e+00> : vector<8xf32>
    %50 = vector.multi_reduction <add>, %1, %cst_40 [1] : vector<8x8xf32> to vector<8xf32>
    %51 = vector.shape_cast %50 : vector<8xf32> to vector<8x1xf32>
    %cst_41 = arith.constant 0.000000e+00 : f32
    %52 = vector.broadcast %cst_41 : f32 to vector<8x1xf32>
    %53 = arith.cmpf ogt, %51, %52 : vector<8x1xf32>
    %cst_42 = arith.constant 0.000000e+00 : f32
    %54 = vector.shape_cast %53 : vector<8x1xi1> to vector<8x1xi1>
    %55 = vector.broadcast %54 : vector<8x1xi1> to vector<8x32xi1>
    %56 = vector.broadcast %cst_42 : f32 to vector<8x32xf32>
    %57 = arith.select %55, %49, %56 : vector<8x32xi1>, vector<8x32xf32>
    %c0_43 = arith.constant 0 : index
    %c0_44 = arith.constant 0 : index
    %58 = vector.load %arg5[%c0_43, %c0_44] : memref<1x32xf32, #tpu.memory_space<vmem>>, vector<1x32xf32>
    %59 = vector.broadcast %58 : vector<1x32xf32> to vector<8x32xf32>
    %60 = arith.addf %57, %59 : vector<8x32xf32>
    %c0_45 = arith.constant 0 : index
    %c0_46 = arith.constant 0 : index
    %61 = vector.load %arg6[%c0_45, %c0_46] : memref<8x32xf32, #tpu.memory_space<vmem>>, vector<8x32xf32>
    tpu.vector_store %arg6[%c0_45, %c0_46], %60 {strides = array<i32>} : memref<8x32xf32, #tpu.memory_space<vmem>>, vector<8x32xf32>,
    return
  }
}

</mosaic_0001>

<llo_original>
// kernel: hgt_forward.1
$region0: #{hgt_forward.1}
  #allocation0 [shape = 'u32[]', space=smem, size = 0x4, offset = 0x4, fixed_abs, tag = 'smem constant byte address 0x4 - core index']
  #allocation1 [shape = 'u32[144,128]{1,0:T(1,128)}', space=vmem, size = 0x12000, scoped, tag = 'internal scratch']
  %s0 = inlined_call_operand.vmem [shape: f32[8,32], index: 0, kind: input, shape index: {}]
  %s1 = inlined_call_operand.vmem [shape: f32[8,8], index: 1, kind: input, shape index: {}]
  %s2 = inlined_call_operand.vmem [shape: f32[3,4,32,8], index: 2, kind: input, shape index: {}]
  %s3 = inlined_call_operand.vmem [shape: f32[3,4,1,8], index: 3, kind: input, shape index: {}]
  %s4 = inlined_call_operand.vmem [shape: f32[4,8,32], index: 4, kind: input, shape index: {}]
  %s5 = inlined_call_operand.vmem [shape: f32[1,32], index: 5, kind: input, shape index: {}]
  %s6 = inlined_call_operand.hbm [shape: f32[8,32], index: 6, kind: output, shape index: {}]
  %s7 = sld [smem:[#allocation0]]
  $region34: #{hgt_forward.1} parent=0
    _
  %s9 = ssub.s32 1, %s7
  %s10 = scalar_select 0, %s9, %s7
  $region1: #{hgt_forward.1} parent=0
    #allocation2 [shape = 'u8[4096]{0}', space=vmem, size = 0x1000, scoped, tag = 'output window, operand 0, single buffered']
    #allocation3 [shape = 's32[1]{0}', space=sflag, size = 0x4, scoped, tag = 'scoped memory for hgt_forward.1']
    %11 = vsyncpa [#allocation3], 0
    // Predicated region
    $region2: #{hgt_forward.1} parent=1 // pred_check
      _
    $region3: #{hgt_forward.1} parent=1 // pred_check_branch
      %13 = sbr.rel (0) target = $region5
    $region4: #{hgt_forward.1} parent=1 // pred_region
      _
    $region5: #{hgt_forward.1} parent=1 // pred_fallthru
      _
    // Predicated region
    $region6: #{hgt_forward.1} parent=1 // pred_check
      _
    $region7: #{hgt_forward.1} parent=1 // pred_check_branch
      %15 = sbr.rel (0) target = $region9
    $region8: #{hgt_forward.1} parent=1 // pred_region
      _
    $region9: #{hgt_forward.1} parent=1 // pred_fallthru
      _
    // Predicated region
    $region10: #{hgt_forward.1} parent=1 // pred_check
      _
    $region11: #{hgt_forward.1} parent=1 // pred_check_branch
      %17 = sbr.rel (0) target = $region13
    $region12: #{hgt_forward.1} parent=1 // pred_region
      _
    $region13: #{hgt_forward.1} parent=1 // pred_fallthru
      _
    // Predicated region
    $region14: #{hgt_forward.1} parent=1 // pred_check
      _
    $region15: #{hgt_forward.1} parent=1 // pred_check_branch
      %19 = sbr.rel (0) target = $region17
    $region16: #{hgt_forward.1} parent=1 // pred_region
      _
    $region17: #{hgt_forward.1} parent=1 // pred_fallthru
      _
    // Predicated region
    $region18: #{hgt_forward.1} parent=1 // pred_check
      _
    $region19: #{hgt_forward.1} parent=1 // pred_check_branch
      %21 = sbr.rel (0) target = $region21
    $region20: #{hgt_forward.1} parent=1 // pred_region
      _
    $region21: #{hgt_forward.1} parent=1 // pred_fallthru
      _
    // Predicated region
    $region22: #{hgt_forward.1} parent=1 // pred_check
      _
    $region23: #{hgt_forward.1} parent=1 // pred_check_branch
      %23 = sbr.rel (0) target = $region25
    $region24: #{hgt_forward.1} parent=1 // pred_region
      _
    $region25: #{hgt_forward.1} parent=1 // pred_fallthru
      _
    %v24 = vld [vmem:[%s0] sm:$0xff]
    %v25 = vld [vmem:[%s1] sm:$0xff]
    %v26 = vld [vmem:[%s2] sm:$0xff]
    %v27 = vld [vmem:[%s2 + $0x8] sm:$0xff]
    %v28 = vld [vmem:[%s2 + $0x10] sm:$0xff]
    %v29 = vld [vmem:[%s2 + $0x18] sm:$0xff]
    %v30 = vld [vmem:[%s2 + $0x20] sm:$0xff]
    %v31 = vld [vmem:[%s2 + $0x28] sm:$0xff]
    %v32 = vld [vmem:[%s2 + $0x30] sm:$0xff]
    %v33 = vld [vmem:[%s2 + $0x38] sm:$0xff]
    %v34 = vld [vmem:[%s2 + $0x40] sm:$0xff]
    %v35 = vld [vmem:[%s2 + $0x48] sm:$0xff]
    %v36 = vld [vmem:[%s2 + $0x50] sm:$0xff]
    %v37 = vld [vmem:[%s2 + $0x58] sm:$0xff]
    %v38 = vld [vmem:[%s2 + $0x60] sm:$0xff]
    %v39 = vld [vmem:[%s2 + $0x68] sm:$0xff]
    %v40 = vld [vmem:[%s2 + $0x70] sm:$0xff]
    %v41 = vld [vmem:[%s2 + $0x78] sm:$0xff]
    %v42 = vld [vmem:[%s3] sm:$0x1]
    %v43 = vld [vmem:[%s3 + $0x1] sm:$0x1]
    %v44 = vld [vmem:[%s3 + $0x2] sm:$0x1]
    %v45 = vld [vmem:[%s3 + $0x3] sm:$0x1]
    %v50 = vlaneseq
    %v51 = vshrl.u32 %v50, 7
    %v52 = vsub.s32 0, %v51
    %v53 = vrot.slane %v42, %v52
    %v54 = vlaneseq
    %v55 = vshrl.u32 %v54, 7
    %v56 = vsub.s32 0, %v55
    %v57 = vrot.slane %v43, %v56
    %v58 = vlaneseq
    %v59 = vshrl.u32 %v58, 7
    %v60 = vsub.s32 0, %v59
    %v61 = vrot.slane %v44, %v60
    %v62 = vlaneseq
    %v63 = vshrl.u32 %v62, 7
    %v64 = vsub.s32 0, %v63
    %v65 = vrot.slane %v45, %v64
    %vm70 = vcmask 261120
    %v72 = vsel %vm70, %v24, 0
    %74 = vmatprep.subr.mxu0 0.0
    %75 = vmatpush1.msra.mxu0 %v26
    %76 = vmatprep.subr.mxu0 0.0
    %77 = vmatpush1.msra.mxu0 %v27
    %78 = vmatprep.subr.mxu0 0.0
    %79 = vmatpush1.msra.mxu0 %v28
    %80 = vmatprep.subr.mxu0 0.0
    %81 = vmatpush1.msra.mxu0 %v29
    %82 = vmatprep.subr.mxu0 0.0
    %83 = vmatpush1.msra.mxu0 0.0
    %84 = vmatprep.subr.mxu0 0.0
    %85 = vmatpush1.msra.mxu0 0.0
    %86 = vmatprep.subr.mxu0 0.0
    %87 = vmatpush1.msra.mxu0 0.0
    %88 = vmatprep.subr.mxu0 0.0
    %89 = vmatpush1.msra.mxu0 0.0
    %90 = vmatprep.subr.mxu0 0.0
    %91 = vmatpush1.msra.mxu0 0.0
    %92 = vmatprep.subr.mxu0 0.0
    %93 = vmatpush1.msra.mxu0 0.0
    %94 = vmatprep.subr.mxu0 0.0
    %95 = vmatpush1.msra.mxu0 0.0
    %96 = vmatprep.subr.mxu0 0.0
    %97 = vmatpush1.msra.mxu0 0.0
    %98 = vmatprep.subr.mxu0 0.0
    %99 = vmatpush1.msra.mxu0 0.0
    %100 = vmatprep.subr.mxu0 0.0
    %101 = vmatpush1.msra.mxu0 0.0
    %102 = vmatprep.subr.mxu0 0.0
    %103 = vmatpush1.msra.mxu0 0.0
    %104 = vmatprep.subr.mxu0 0.0
    %105 = vmatpush1.msra.mxu0 0.0
    %106 = vmatprep.subr.mxu0 0.0
    %107 = vmatpush1.msra.mxu0 0.0
    %108 = vmatprep.subr.mxu0 0.0
    %109 = vmatpush1.msra.mxu0 0.0
    %110 = vmatprep.subr.mxu0 0.0
    %111 = vmatpush1.msra.mxu0 0.0
    %112 = vmatprep.subr.mxu0 0.0
    %113 = vmatpush1.msra.mxu0 0.0
    %114 = vmatprep.subr.mxu0 0.0
    %115 = vmatpush1.msra.mxu0 0.0
    %116 = vmatprep.subr.mxu0 0.0
    %117 = vmatpush1.msra.mxu0 0.0
    %118 = vmatprep.subr.mxu0 0.0
    %119 = vmatpush1.msra.mxu0 0.0
    %120 = vmatprep.subr.mxu0 0.0
    %121 = vmatpush1.msra.mxu0 0.0
    %122 = vmatprep.subr.mxu0 0.0
    %123 = vmatpush1.msra.mxu0 0.0
    %124 = vmatprep.subr.mxu0 0.0
    %125 = vmatpush1.msra.mxu0 0.0
    %126 = vmatprep.subr.mxu0 0.0
    %127 = vmatpush1.msra.mxu0 0.0
    %128 = vmatprep.subr.mxu0 0.0
    %129 = vmatpush1.msra.mxu0 0.0
    %130 = vmatprep.subr.mxu0 0.0
    %131 = vmatpush1.msra.mxu0 0.0
    %132 = vmatprep.subr.mxu0 0.0
    %133 = vmatpush1.msra.mxu0 0.0
    %134 = vmatprep.subr.mxu0 0.0
    %135 = vmatpush1.msra.mxu0 0.0
    %136 = vmatprep.subr.mxu0 0.0
    %137 = vmatpush1.msra.mxu0 0.0
    %138 = vmatprep.mubr.f32.mxu0 0.0
    %139 = vmatmul.mubr.f32.gmra.mrb[0].mxu0 %v72
    %v140 = vpop.f32.mrb[0].mxu0
    %v141 = vadd.f32 %v53, %v140
    %v142 = vpop.f32.mrb[0].mxu0
    %143 = vdwg.mxu0
    %144 = vmatprep.subr.mxu0 0.0
    %145 = vmatpush1.msra.mxu0 %v30
    %146 = vmatprep.subr.mxu0 0.0
    %147 = vmatpush1.msra.mxu0 %v31
    %148 = vmatprep.subr.mxu0 0.0
    %149 = vmatpush1.msra.mxu0 %v32
    %150 = vmatprep.subr.mxu0 0.0
    %151 = vmatpush1.msra.mxu0 %v33
    %152 = vmatprep.subr.mxu0 0.0
    %153 = vmatpush1.msra.mxu0 0.0
    %154 = vmatprep.subr.mxu0 0.0
    %155 = vmatpush1.msra.mxu0 0.0
    %156 = vmatprep.subr.mxu0 0.0
    %157 = vmatpush1.msra.mxu0 0.0
    %158 = vmatprep.subr.mxu0 0.0
    %159 = vmatpush1.msra.mxu0 0.0
    %160 = vmatprep.subr.mxu0 0.0
    %161 = vmatpush1.msra.mxu0 0.0
    %162 = vmatprep.subr.mxu0 0.0
    %163 = vmatpush1.msra.mxu0 0.0
    %164 = vmatprep.subr.mxu0 0.0
    %165 = vmatpush1.msra.mxu0 0.0
    %166 = vmatprep.subr.mxu0 0.0
    %167 = vmatpush1.msra.mxu0 0.0
    %168 = vmatprep.subr.mxu0 0.0
    %169 = vmatpush1.msra.mxu0 0.0
    %170 = vmatprep.subr.mxu0 0.0
    %171 = vmatpush1.msra.mxu0 0.0
    %172 = vmatprep.subr.mxu0 0.0
    %173 = vmatpush1.msra.mxu0 0.0
    %174 = vmatprep.subr.mxu0 0.0
    %175 = vmatpush1.msra.mxu0 0.0
    %176 = vmatprep.subr.mxu0 0.0
    %177 = vmatpush1.msra.mxu0 0.0
    %178 = vmatprep.subr.mxu0 0.0
    %179 = vmatpush1.msra.mxu0 0.0
    %180 = vmatprep.subr.mxu0 0.0
    %181 = vmatpush1.msra.mxu0 0.0
    %182 = vmatprep.subr.mxu0 0.0
    %183 = vmatpush1.msra.mxu0 0.0
    %184 = vmatprep.subr.mxu0 0.0
    %185 = vmatpush1.msra.mxu0 0.0
    %186 = vmatprep.subr.mxu0 0.0
    %187 = vmatpush1.msra.mxu0 0.0
    %188 = vmatprep.subr.mxu0 0.0
    %189 = vmatpush1.msra.mxu0 0.0
    %190 = vmatprep.subr.mxu0 0.0
    %191 = vmatpush1.msra.mxu0 0.0
    %192 = vmatprep.subr.mxu0 0.0
    %193 = vmatpush1.msra.mxu0 0.0
    %194 = vmatprep.subr.mxu0 0.0
    %195 = vmatpush1.msra.mxu0 0.0
    %196 = vmatprep.subr.mxu0 0.0
    %197 = vmatpush1.msra.mxu0 0.0
    %198 = vmatprep.subr.mxu0 0.0
    %199 = vmatpush1.msra.mxu0 0.0
    %200 = vmatprep.subr.mxu0 0.0
    %201 = vmatpush1.msra.mxu0 0.0
    %202 = vmatprep.subr.mxu0 0.0
    %203 = vmatpush1.msra.mxu0 0.0
    %204 = vmatprep.subr.mxu0 0.0
    %205 = vmatpush1.msra.mxu0 0.0
    %206 = vmatprep.subr.mxu0 0.0
    %207 = vmatpush1.msra.mxu0 0.0
    %208 = vmatprep.mubr.f32.mxu0 0.0
    %209 = vmatmul.mubr.f32.gmra.mrb[0].mxu0 %v72
    %v210 = vpop.f32.mrb[0].mxu0
    %v211 = vadd.f32 %v57, %v210
    %v212 = vpop.f32.mrb[0].mxu0
    %213 = vdwg.mxu0
    %214 = vmatprep.subr.mxu0 0.0
    %215 = vmatpush1.msra.mxu0 %v34
    %216 = vmatprep.subr.mxu0 0.0
    %217 = vmatpush1.msra.mxu0 %v35
    %218 = vmatprep.subr.mxu0 0.0
    %219 = vmatpush1.msra.mxu0 %v36
    %220 = vmatprep.subr.mxu0 0.0
    %221 = vmatpush1.msra.mxu0 %v37
    %222 = vmatprep.subr.mxu0 0.0
    %223 = vmatpush1.msra.mxu0 0.0
    %224 = vmatprep.subr.mxu0 0.0
    %225 = vmatpush1.msra.mxu0 0.0
    %226 = vmatprep.subr.mxu0 0.0
    %227 = vmatpush1.msra.mxu0 0.0
    %228 = vmatprep.subr.mxu0 0.0
    %229 = vmatpush1.msra.mxu0 0.0
    %230 = vmatprep.subr.mxu0 0.0
    %231 = vmatpush1.msra.mxu0 0.0
    %232 = vmatprep.subr.mxu0 0.0
    %233 = vmatpush1.msra.mxu0 0.0
    %234 = vmatprep.subr.mxu0 0.0
    %235 = vmatpush1.msra.mxu0 0.0
    %236 = vmatprep.subr.mxu0 0.0
    %237 = vmatpush1.msra.mxu0 0.0
    %238 = vmatprep.subr.mxu0 0.0
    %239 = vmatpush1.msra.mxu0 0.0
    %240 = vmatprep.subr.mxu0 0.0
    %241 = vmatpush1.msra.mxu0 0.0
    %242 = vmatprep.subr.mxu0 0.0
    %243 = vmatpush1.msra.mxu0 0.0
    %244 = vmatprep.subr.mxu0 0.0
    %245 = vmatpush1.msra.mxu0 0.0
    %246 = vmatprep.subr.mxu0 0.0
    %247 = vmatpush1.msra.mxu0 0.0
    %248 = vmatprep.subr.mxu0 0.0
    %249 = vmatpush1.msra.mxu0 0.0
    %250 = vmatprep.subr.mxu0 0.0
    %251 = vmatpush1.msra.mxu0 0.0
    %252 = vmatprep.subr.mxu0 0.0
    %253 = vmatpush1.msra.mxu0 0.0
    %254 = vmatprep.subr.mxu0 0.0
    %255 = vmatpush1.msra.mxu0 0.0
    %256 = vmatprep.subr.mxu0 0.0
    %257 = vmatpush1.msra.mxu0 0.0
    %258 = vmatprep.subr.mxu0 0.0
    %259 = vmatpush1.msra.mxu0 0.0
    %260 = vmatprep.subr.mxu0 0.0
    %261 = vmatpush1.msra.mxu0 0.0
    %262 = vmatprep.subr.mxu0 0.0
    %263 = vmatpush1.msra.mxu0 0.0
    %264 = vmatprep.subr.mxu0 0.0
    %265 = vmatpush1.msra.mxu0 0.0
    %266 = vmatprep.subr.mxu0 0.0
    %267 = vmatpush1.msra.mxu0 0.0
    %268 = vmatprep.subr.mxu0 0.0
    %269 = vmatpush1.msra.mxu0 0.0
    %270 = vmatprep.subr.mxu0 0.0
    %271 = vmatpush1.msra.mxu0 0.0
    %272 = vmatprep.subr.mxu0 0.0
    %273 = vmatpush1.msra.mxu0 0.0
    %274 = vmatprep.subr.mxu0 0.0
    %275 = vmatpush1.msra.mxu0 0.0
    %276 = vmatprep.subr.mxu0 0.0
    %277 = vmatpush1.msra.mxu0 0.0
    %278 = vmatprep.mubr.f32.mxu0 0.0
    %279 = vmatmul.mubr.f32.gmra.mrb[0].mxu0 %v72
    %v280 = vpop.f32.mrb[0].mxu0
    %v281 = vadd.f32 %v61, %v280
    %v282 = vpop.f32.mrb[0].mxu0
    %283 = vdwg.mxu0
    %284 = vmatprep.subr.mxu0 0.0
    %285 = vmatpush1.msra.mxu0 %v38
    %286 = vmatprep.subr.mxu0 0.0
    %287 = vmatpush1.msra.mxu0 %v39
    %288 = vmatprep.subr.mxu0 0.0
    %289 = vmatpush1.msra.mxu0 %v40
    %290 = vmatprep.subr.mxu0 0.0
    %291 = vmatpush1.msra.mxu0 %v41
    %292 = vmatprep.subr.mxu0 0.0
    %293 = vmatpush1.msra.mxu0 0.0
    %294 = vmatprep.subr.mxu0 0.0
    %295 = vmatpush1.msra.mxu0 0.0
    %296 = vmatprep.subr.mxu0 0.0
    %297 = vmatpush1.msra.mxu0 0.0
    %298 = vmatprep.subr.mxu0 0.0
    %299 = vmatpush1.msra.mxu0 0.0
    %300 = vmatprep.subr.mxu0 0.0
    %301 = vmatpush1.msra.mxu0 0.0
    %302 = vmatprep.subr.mxu0 0.0
    %303 = vmatpush1.msra.mxu0 0.0
    %304 = vmatprep.subr.mxu0 0.0
    %305 = vmatpush1.msra.mxu0 0.0
    %306 = vmatprep.subr.mxu0 0.0
    %307 = vmatpush1.msra.mxu0 0.0
    %308 = vmatprep.subr.mxu0 0.0
    %309 = vmatpush1.msra.mxu0 0.0
    %310 = vmatprep.subr.mxu0 0.0
    %311 = vmatpush1.msra.mxu0 0.0
    %312 = vmatprep.subr.mxu0 0.0
    %313 = vmatpush1.msra.mxu0 0.0
    %314 = vmatprep.subr.mxu0 0.0
    %315 = vmatpush1.msra.mxu0 0.0
    %316 = vmatprep.subr.mxu0 0.0
    %317 = vmatpush1.msra.mxu0 0.0
    %318 = vmatprep.subr.mxu0 0.0
    %319 = vmatpush1.msra.mxu0 0.0
    %320 = vmatprep.subr.mxu0 0.0
    %321 = vmatpush1.msra.mxu0 0.0
    %322 = vmatprep.subr.mxu0 0.0
    %323 = vmatpush1.msra.mxu0 0.0
    %324 = vmatprep.subr.mxu0 0.0
    %325 = vmatpush1.msra.mxu0 0.0
    %326 = vmatprep.subr.mxu0 0.0
    %327 = vmatpush1.msra.mxu0 0.0
    %328 = vmatprep.subr.mxu0 0.0
    %329 = vmatpush1.msra.mxu0 0.0
    %330 = vmatprep.subr.mxu0 0.0
    %331 = vmatpush1.msra.mxu0 0.0
    %332 = vmatprep.subr.mxu0 0.0
    %333 = vmatpush1.msra.mxu0 0.0
    %334 = vmatprep.subr.mxu0 0.0
    %335 = vmatpush1.msra.mxu0 0.0
    %336 = vmatprep.subr.mxu0 0.0
    %337 = vmatpush1.msra.mxu0 0.0
    %338 = vmatprep.subr.mxu0 0.0
    %339 = vmatpush1.msra.mxu0 0.0
    %340 = vmatprep.subr.mxu0 0.0
    %341 = vmatpush1.msra.mxu0 0.0
    %342 = vmatprep.subr.mxu0 0.0
    %343 = vmatpush1.msra.mxu0 0.0
    %344 = vmatprep.subr.mxu0 0.0
    %345 = vmatpush1.msra.mxu0 0.0
    %346 = vmatprep.subr.mxu0 0.0
    %347 = vmatpush1.msra.mxu0 0.0
    %348 = vmatprep.mubr.f32.mxu0 0.0
    %349 = vmatmul.mubr.f32.gmra.mrb[0].mxu0 %v72
    %v350 = vpop.f32.mrb[0].mxu0
    %v351 = vadd.f32 %v65, %v350
    %v352 = vpop.f32.mrb[0].mxu0
    %353 = vdwg.mxu0
    %s354 = scalar_lea.vmem %s2, 128
    %v355 = vld [vmem:[%s354] sm:$0xff]
    %v356 = vld [vmem:[%s354 + $0x8] sm:$0xff]
    %v357 = vld [vmem:[%s354 + $0x10] sm:$0xff]
    %v358 = vld [vmem:[%s354 + $0x18] sm:$0xff]
    %v359 = vld [vmem:[%s354 + $0x20] sm:$0xff]
    %v360 = vld [vmem:[%s354 + $0x28] sm:$0xff]
    %v361 = vld [vmem:[%s354 + $0x30] sm:$0xff]
    %v362 = vld [vmem:[%s354 + $0x38] sm:$0xff]
    %v363 = vld [vmem:[%s354 + $0x40] sm:$0xff]
    %v364 = vld [vmem:[%s354 + $0x48] sm:$0xff]
    %v365 = vld [vmem:[%s354 + $0x50] sm:$0xff]
    %v366 = vld [vmem:[%s354 + $0x58] sm:$0xff]
    %v367 = vld [vmem:[%s354 + $0x60] sm:$0xff]
    %v368 = vld [vmem:[%s354 + $0x68] sm:$0xff]
    %v369 = vld [vmem:[%s354 + $0x70] sm:$0xff]
    %v370 = vld [vmem:[%s354 + $0x78] sm:$0xff]
    %s371 = scalar_lea.vmem %s3, 4
    %v372 = vld [vmem:[%s371] sm:$0x1]
    %v373 = vld [vmem:[%s371 + $0x1] sm:$0x1]
    %v374 = vld [vmem:[%s371 + $0x2] sm:$0x1]
    %v375 = vld [vmem:[%s371 + $0x3] sm:$0x1]
    %v380 = vlaneseq
    %v381 = vshrl.u32 %v380, 7
    %v382 = vsub.s32 0, %v381
    %v383 = vrot.slane %v372, %v382
    %v384 = vlaneseq
    %v385 = vshrl.u32 %v384, 7
    %v386 = vsub.s32 0, %v385
    %v387 = vrot.slane %v373, %v386
    %v388 = vlaneseq
    %v389 = vshrl.u32 %v388, 7
    %v390 = vsub.s32 0, %v389
    %v391 = vrot.slane %v374, %v390
    %v392 = vlaneseq
    %v393 = vshrl.u32 %v392, 7
    %v394 = vsub.s32 0, %v393
    %v395 = vrot.slane %v375, %v394
    %400 = vmatprep.subr.mxu0 0.0
    %401 = vmatpush1.msra.mxu0 %v355
    %402 = vmatprep.subr.mxu0 0.0
    %403 = vmatpush1.msra.mxu0 %v356
    %404 = vmatprep.subr.mxu0 0.0
    %405 = vmatpush1.msra.mxu0 %v357
    %406 = vmatprep.subr.mxu0 0.0
    %407 = vmatpush1.msra.mxu0 %v358
    %408 = vmatprep.subr.mxu0 0.0
    %409 = vmatpush1.msra.mxu0 0.0
    %410 = vmatprep.subr.mxu0 0.0
    %411 = vmatpush1.msra.mxu0 0.0
    %412 = vmatprep.subr.mxu0 0.0
    %413 = vmatpush1.msra.mxu0 0.0
    %414 = vmatprep.subr.mxu0 0.0
    %415 = vmatpush1.msra.mxu0 0.0
    %416 = vmatprep.subr.mxu0 0.0
    %417 = vmatpush1.msra.mxu0 0.0
    %418 = vmatprep.subr.mxu0 0.0
    %419 = vmatpush1.msra.mxu0 0.0
    %420 = vmatprep.subr.mxu0 0.0
    %421 = vmatpush1.msra.mxu0 0.0
    %422 = vmatprep.subr.mxu0 0.0
    %423 = vmatpush1.msra.mxu0 0.0
    %424 = vmatprep.subr.mxu0 0.0
    %425 = vmatpush1.msra.mxu0 0.0
    %426 = vmatprep.subr.mxu0 0.0
    %427 = vmatpush1.msra.mxu0 0.0
    %428 = vmatprep.subr.mxu0 0.0
    %429 = vmatpush1.msra.mxu0 0.0
    %430 = vmatprep.subr.mxu0 0.0
    %431 = vmatpush1.msra.mxu0 0.0
    %432 = vmatprep.subr.mxu0 0.0
    %433 = vmatpush1.msra.mxu0 0.0
    %434 = vmatprep.subr.mxu0 0.0
    %435 = vmatpush1.msra.mxu0 0.0
    %436 = vmatprep.subr.mxu0 0.0
    %437 = vmatpush1.msra.mxu0 0.0
    %438 = vmatprep.subr.mxu0 0.0
    %439 = vmatpush1.msra.mxu0 0.0
    %440 = vmatprep.subr.mxu0 0.0
    %441 = vmatpush1.msra.mxu0 0.0
    %442 = vmatprep.subr.mxu0 0.0
    %443 = vmatpush1.msra.mxu0 0.0
    %444 = vmatprep.subr.mxu0 0.0
    %445 = vmatpush1.msra.mxu0 0.0
    %446 = vmatprep.subr.mxu0 0.0
    %447 = vmatpush1.msra.mxu0 0.0
    %448 = vmatprep.subr.mxu0 0.0
    %449 = vmatpush1.msra.mxu0 0.0
    %450 = vmatprep.subr.mxu0 0.0
    %451 = vmatpush1.msra.mxu0 0.0
    %452 = vmatprep.subr.mxu0 0.0
    %453 = vmatpush1.msra.mxu0 0.0
    %454 = vmatprep.subr.mxu0 0.0
    %455 = vmatpush1.msra.mxu0 0.0
    %456 = vmatprep.subr.mxu0 0.0
    %457 = vmatpush1.msra.mxu0 0.0
    %458 = vmatprep.subr.mxu0 0.0
    %459 = vmatpush1.msra.mxu0 0.0
    %460 = vmatprep.subr.mxu0 0.0
    %461 = vmatpush1.msra.mxu0 0.0
    %462 = vmatprep.subr.mxu0 0.0
    %463 = vmatpush1.msra.mxu0 0.0
    %464 = vmatprep.mubr.f32.mxu0 0.0
    %465 = vmatmul.mubr.f32.gmra.mrb[0].mxu0 %v72
    %v466 = vpop.f32.mrb[0].mxu0
    %v467 = vadd.f32 %v383, %v466
    %v468 = vpop.f32.mrb[0].mxu0
    %469 = vdwg.mxu0
    %470 = vmatprep.subr.mxu0 0.0
    %471 = vmatpush1.msra.mxu0 %v359
    %472 = vmatprep.subr.mxu0 0.0
    %473 = vmatpush1.msra.mxu0 %v360
    %474 = vmatprep.subr.mxu0 0.0
    %475 = vmatpush1.msra.mxu0 %v361
    %476 = vmatprep.subr.mxu0 0.0
    %477 = vmatpush1.msra.mxu0 %v362
    %478 = vmatprep.subr.mxu0 0.0
    %479 = vmatpush1.msra.mxu0 0.0
    %480 = vmatprep.subr.mxu0 0.0
    %481 = vmatpush1.msra.mxu0 0.0
    %482 = vmatprep.subr.mxu0 0.0
    %483 = vmatpush1.msra.mxu0 0.0
    %484 = vmatprep.subr.mxu0 0.0
    %485 = vmatpush1.msra.mxu0 0.0
    %486 = vmatprep.subr.mxu0 0.0
    %487 = vmatpush1.msra.mxu0 0.0
    %488 = vmatprep.subr.mxu0 0.0
    %489 = vmatpush1.msra.mxu0 0.0
    %490 = vmatprep.subr.mxu0 0.0
    %491 = vmatpush1.msra.mxu0 0.0
    %492 = vmatprep.subr.mxu0 0.0
    %493 = vmatpush1.msra.mxu0 0.0
    %494 = vmatprep.subr.mxu0 0.0
    %495 = vmatpush1.msra.mxu0 0.0
    %496 = vmatprep.subr.mxu0 0.0
    %497 = vmatpush1.msra.mxu0 0.0
    %498 = vmatprep.subr.mxu0 0.0
    %499 = vmatpush1.msra.mxu0 0.0
    %500 = vmatprep.subr.mxu0 0.0
    %501 = vmatpush1.msra.mxu0 0.0
    %502 = vmatprep.subr.mxu0 0.0
    %503 = vmatpush1.msra.mxu0 0.0
    %504 = vmatprep.subr.mxu0 0.0
    %505 = vmatpush1.msra.mxu0 0.0
    %506 = vmatprep.subr.mxu0 0.0
    %507 = vmatpush1.msra.mxu0 0.0
    %508 = vmatprep.subr.mxu0 0.0
    %509 = vmatpush1.msra.mxu0 0.0
    %510 = vmatprep.subr.mxu0 0.0
    %511 = vmatpush1.msra.mxu0 0.0
    %512 = vmatprep.subr.mxu0 0.0
    %513 = vmatpush1.msra.mxu0 0.0
    %514 = vmatprep.subr.mxu0 0.0
    %515 = vmatpush1.msra.mxu0 0.0
    %516 = vmatprep.subr.mxu0 0.0
    %517 = vmatpush1.msra.mxu0 0.0
    %518 = vmatprep.subr.mxu0 0.0
    %519 = vmatpush1.msra.mxu0 0.0
    %520 = vmatprep.subr.mxu0 0.0
    %521 = vmatpush1.msra.mxu0 0.0
    %522 = vmatprep.subr.mxu0 0.0
    %523 = vmatpush1.msra.mxu0 0.0
    %524 = vmatprep.subr.mxu0 0.0
    %525 = vmatpush1.msra.mxu0 0.0
    %526 = vmatprep.subr.mxu0 0.0
    %527 = vmatpush1.msra.mxu0 0.0
    %528 = vmatprep.subr.mxu0 0.0
    %529 = vmatpush1.msra.mxu0 0.0
    %530 = vmatprep.subr.mxu0 0.0
    %531 = vmatpush1.msra.mxu0 0.0
    %532 = vmatprep.subr.mxu0 0.0
    %533 = vmatpush1.msra.mxu0 0.0
    %534 = vmatprep.mubr.f32.mxu0 0.0
    %535 = vmatmul.mubr.f32.gmra.mrb[0].mxu0 %v72
    %v536 = vpop.f32.mrb[0].mxu0
    %v537 = vadd.f32 %v387, %v536
    %v538 = vpop.f32.mrb[0].mxu0
    %539 = vdwg.mxu0
    %540 = vmatprep.subr.mxu0 0.0
    %541 = vmatpush1.msra.mxu0 %v363
    %542 = vmatprep.subr.mxu0 0.0
    %543 = vmatpush1.msra.mxu0 %v364
    %544 = vmatprep.subr.mxu0 0.0
    %545 = vmatpush1.msra.mxu0 %v365
    %546 = vmatprep.subr.mxu0 0.0
    %547 = vmatpush1.msra.mxu0 %v366
    %548 = vmatprep.subr.mxu0 0.0
    %549 = vmatpush1.msra.mxu0 0.0
    %550 = vmatprep.subr.mxu0 0.0
    %551 = vmatpush1.msra.mxu0 0.0
    %552 = vmatprep.subr.mxu0 0.0
    %553 = vmatpush1.msra.mxu0 0.0
    %554 = vmatprep.subr.mxu0 0.0
    %555 = vmatpush1.msra.mxu0 0.0
    %556 = vmatprep.subr.mxu0 0.0
    %557 = vmatpush1.msra.mxu0 0.0
    %558 = vmatprep.subr.mxu0 0.0
    %559 = vmatpush1.msra.mxu0 0.0
    %560 = vmatprep.subr.mxu0 0.0
    %561 = vmatpush1.msra.mxu0 0.0
    %562 = vmatprep.subr.mxu0 0.0
    %563 = vmatpush1.msra.mxu0 0.0
    %564 = vmatprep.subr.mxu0 0.0
    %565 = vmatpush1.msra.mxu0 0.0
    %566 = vmatprep.subr.mxu0 0.0
    %567 = vmatpush1.msra.mxu0 0.0
    %568 = vmatprep.subr.mxu0 0.0
    %569 = vmatpush1.msra.mxu0 0.0
    %570 = vmatprep.subr.mxu0 0.0
    %571 = vmatpush1.msra.mxu0 0.0
    %572 = vmatprep.subr.mxu0 0.0
    %573 = vmatpush1.msra.mxu0 0.0
    %574 = vmatprep.subr.mxu0 0.0
    %575 = vmatpush1.msra.mxu0 0.0
    %576 = vmatprep.subr.mxu0 0.0
    %577 = vmatpush1.msra.mxu0 0.0
    %578 = vmatprep.subr.mxu0 0.0
    %579 = vmatpush1.msra.mxu0 0.0
    %580 = vmatprep.subr.mxu0 0.0
    %581 = vmatpush1.msra.mxu0 0.0
    %582 = vmatprep.subr.mxu0 0.0
    %583 = vmatpush1.msra.mxu0 0.0
    %584 = vmatprep.subr.mxu0 0.0
    %585 = vmatpush1.msra.mxu0 0.0
    %586 = vmatprep.subr.mxu0 0.0
    %587 = vmatpush1.msra.mxu0 0.0
    %588 = vmatprep.subr.mxu0 0.0
    %589 = vmatpush1.msra.mxu0 0.0
    %590 = vmatprep.subr.mxu0 0.0
    %591 = vmatpush1.msra.mxu0 0.0
    %592 = vmatprep.subr.mxu0 0.0
    %593 = vmatpush1.msra.mxu0 0.0
    %594 = vmatprep.subr.mxu0 0.0
    %595 = vmatpush1.msra.mxu0 0.0
    %596 = vmatprep.subr.mxu0 0.0
    %597 = vmatpush1.msra.mxu0 0.0
    %598 = vmatprep.subr.mxu0 0.0
    %599 = vmatpush1.msra.mxu0 0.0
    %600 = vmatprep.subr.mxu0 0.0
    %601 = vmatpush1.msra.mxu0 0.0
    %602 = vmatprep.subr.mxu0 0.0
    %603 = vmatpush1.msra.mxu0 0.0
    %604 = vmatprep.mubr.f32.mxu0 0.0
    %605 = vmatmul.mubr.f32.gmra.mrb[0].mxu0 %v72
    %v606 = vpop.f32.mrb[0].mxu0
    %v607 = vadd.f32 %v391, %v606
    %v608 = vpop.f32.mrb[0].mxu0
    %609 = vdwg.mxu0
    %610 = vmatprep.subr.mxu0 0.0
    %611 = vmatpush1.msra.mxu0 %v367
    %612 = vmatprep.subr.mxu0 0.0
    %613 = vmatpush1.msra.mxu0 %v368
    %614 = vmatprep.subr.mxu0 0.0
    %615 = vmatpush1.msra.mxu0 %v369
    %616 = vmatprep.subr.mxu0 0.0
    %617 = vmatpush1.msra.mxu0 %v370
    %618 = vmatprep.subr.mxu0 0.0
    %619 = vmatpush1.msra.mxu0 0.0
    %620 = vmatprep.subr.mxu0 0.0
    %621 = vmatpush1.msra.mxu0 0.0
    %622 = vmatprep.subr.mxu0 0.0
    %623 = vmatpush1.msra.mxu0 0.0
    %624 = vmatprep.subr.mxu0 0.0
    %625 = vmatpush1.msra.mxu0 0.0
    %626 = vmatprep.subr.mxu0 0.0
    %627 = vmatpush1.msra.mxu0 0.0
    %628 = vmatprep.subr.mxu0 0.0
    %629 = vmatpush1.msra.mxu0 0.0
    %630 = vmatprep.subr.mxu0 0.0
    %631 = vmatpush1.msra.mxu0 0.0
    %632 = vmatprep.subr.mxu0 0.0
    %633 = vmatpush1.msra.mxu0 0.0
    %634 = vmatprep.subr.mxu0 0.0
    %635 = vmatpush1.msra.mxu0 0.0
    %636 = vmatprep.subr.mxu0 0.0
    %637 = vmatpush1.msra.mxu0 0.0
    %638 = vmatprep.subr.mxu0 0.0
    %639 = vmatpush1.msra.mxu0 0.0
    %640 = vmatprep.subr.mxu0 0.0
    %641 = vmatpush1.msra.mxu0 0.0
    %642 = vmatprep.subr.mxu0 0.0
    %643 = vmatpush1.msra.mxu0 0.0
    %644 = vmatprep.subr.mxu0 0.0
    %645 = vmatpush1.msra.mxu0 0.0
    %646 = vmatprep.subr.mxu0 0.0
    %647 = vmatpush1.msra.mxu0 0.0
    %648 = vmatprep.subr.mxu0 0.0
    %649 = vmatpush1.msra.mxu0 0.0
    %650 = vmatprep.subr.mxu0 0.0
    %651 = vmatpush1.msra.mxu0 0.0
    %652 = vmatprep.subr.mxu0 0.0
    %653 = vmatpush1.msra.mxu0 0.0
    %654 = vmatprep.subr.mxu0 0.0
    %655 = vmatpush1.msra.mxu0 0.0
    %656 = vmatprep.subr.mxu0 0.0
    %657 = vmatpush1.msra.mxu0 0.0
    %658 = vmatprep.subr.mxu0 0.0
    %659 = vmatpush1.msra.mxu0 0.0
    %660 = vmatprep.subr.mxu0 0.0
    %661 = vmatpush1.msra.mxu0 0.0
    %662 = vmatprep.subr.mxu0 0.0
    %663 = vmatpush1.msra.mxu0 0.0
    %664 = vmatprep.subr.mxu0 0.0
    %665 = vmatpush1.msra.mxu0 0.0
    %666 = vmatprep.subr.mxu0 0.0
    %667 = vmatpush1.msra.mxu0 0.0
    %668 = vmatprep.subr.mxu0 0.0
    %669 = vmatpush1.msra.mxu0 0.0
    %670 = vmatprep.subr.mxu0 0.0
    %671 = vmatpush1.msra.mxu0 0.0
    %672 = vmatprep.subr.mxu0 0.0
    %673 = vmatpush1.msra.mxu0 0.0
    %674 = vmatprep.mubr.f32.mxu0 0.0
    %675 = vmatmul.mubr.f32.gmra.mrb[0].mxu0 %v72
    %v676 = vpop.f32.mrb[0].mxu0
    %v677 = vadd.f32 %v395, %v676
    %v678 = vpop.f32.mrb[0].mxu0
    %679 = vdwg.mxu0
    %s680 = scalar_lea.vmem %s2, 256
    %v681 = vld [vmem:[%s680] sm:$0xff]
    %v682 = vld [vmem:[%s680 + $0x8] sm:$0xff]
    %v683 = vld [vmem:[%s680 + $0x10] sm:$0xff]
    %v684 = vld [vmem:[%s680 + $0x18] sm:$0xff]
    %v685 = vld [vmem:[%s680 + $0x20] sm:$0xff]
    %v686 = vld [vmem:[%s680 + $0x28] sm:$0xff]
    %v687 = vld [vmem:[%s680 + $0x30] sm:$0xff]
    %v688 = vld [vmem:[%s680 + $0x38] sm:$0xff]
    %v689 = vld [vmem:[%s680 + $0x40] sm:$0xff]
    %v690 = vld [vmem:[%s680 + $0x48] sm:$0xff]
    %v691 = vld [vmem:[%s680 + $0x50] sm:$0xff]
    %v692 = vld [vmem:[%s680 + $0x58] sm:$0xff]
    %v693 = vld [vmem:[%s680 + $0x60] sm:$0xff]
    %v694 = vld [vmem:[%s680 + $0x68] sm:$0xff]
    %v695 = vld [vmem:[%s680 + $0x70] sm:$0xff]
    %v696 = vld [vmem:[%s680 + $0x78] sm:$0xff]
    %s697 = scalar_lea.vmem %s3, 8
    %v698 = vld [vmem:[%s697] sm:$0x1]
    %v699 = vld [vmem:[%s697 + $0x1] sm:$0x1]
    %v700 = vld [vmem:[%s697 + $0x2] sm:$0x1]
    %v701 = vld [vmem:[%s697 + $0x3] sm:$0x1]
    %v706 = vlaneseq
    %v707 = vshrl.u32 %v706, 7
    %v708 = vsub.s32 0, %v707
    %v709 = vrot.slane %v698, %v708
    %v710 = vlaneseq
    %v711 = vshrl.u32 %v710, 7
    %v712 = vsub.s32 0, %v711
    %v713 = vrot.slane %v699, %v712
    %v714 = vlaneseq
    %v715 = vshrl.u32 %v714, 7
    %v716 = vsub.s32 0, %v715
    %v717 = vrot.slane %v700, %v716
    %v718 = vlaneseq
    %v719 = vshrl.u32 %v718, 7
    %v720 = vsub.s32 0, %v719
    %v721 = vrot.slane %v701, %v720
    %726 = vmatprep.subr.mxu0 0.0
    %727 = vmatpush1.msra.mxu0 %v681
    %728 = vmatprep.subr.mxu0 0.0
    %729 = vmatpush1.msra.mxu0 %v682
    %730 = vmatprep.subr.mxu0 0.0
    %731 = vmatpush1.msra.mxu0 %v683
    %732 = vmatprep.subr.mxu0 0.0
    %733 = vmatpush1.msra.mxu0 %v684
    %734 = vmatprep.subr.mxu0 0.0
    %735 = vmatpush1.msra.mxu0 0.0
    %736 = vmatprep.subr.mxu0 0.0
    %737 = vmatpush1.msra.mxu0 0.0
    %738 = vmatprep.subr.mxu0 0.0
    %739 = vmatpush1.msra.mxu0 0.0
    %740 = vmatprep.subr.mxu0 0.0
    %741 = vmatpush1.msra.mxu0 0.0
    %742 = vmatprep.subr.mxu0 0.0
    %743 = vmatpush1.msra.mxu0 0.0
    %744 = vmatprep.subr.mxu0 0.0
    %745 = vmatpush1.msra.mxu0 0.0
    %746 = vmatprep.subr.mxu0 0.0
    %747 = vmatpush1.msra.mxu0 0.0
    %748 = vmatprep.subr.mxu0 0.0
    %749 = vmatpush1.msra.mxu0 0.0
    %750 = vmatprep.subr.mxu0 0.0
    %751 = vmatpush1.msra.mxu0 0.0
    %752 = vmatprep.subr.mxu0 0.0
    %753 = vmatpush1.msra.mxu0 0.0
    %754 = vmatprep.subr.mxu0 0.0
    %755 = vmatpush1.msra.mxu0 0.0
    %756 = vmatprep.subr.mxu0 0.0
    %757 = vmatpush1.msra.mxu0 0.0
    %758 = vmatprep.subr.mxu0 0.0
    %759 = vmatpush1.msra.mxu0 0.0
    %760 = vmatprep.subr.mxu0 0.0
    %761 = vmatpush1.msra.mxu0 0.0
    %762 = vmatprep.subr.mxu0 0.0
    %763 = vmatpush1.msra.mxu0 0.0
    %764 = vmatprep.subr.mxu0 0.0
    %765 = vmatpush1.msra.mxu0 0.0
    %766 = vmatprep.subr.mxu0 0.0
    %767 = vmatpush1.msra.mxu0 0.0
    %768 = vmatprep.subr.mxu0 0.0
    %769 = vmatpush1.msra.mxu0 0.0
    %770 = vmatprep.subr.mxu0 0.0
    %771 = vmatpush1.msra.mxu0 0.0
    %772 = vmatprep.subr.mxu0 0.0
    %773 = vmatpush1.msra.mxu0 0.0
    %774 = vmatprep.subr.mxu0 0.0
    %775 = vmatpush1.msra.mxu0 0.0
    %776 = vmatprep.subr.mxu0 0.0
    %777 = vmatpush1.msra.mxu0 0.0
    %778 = vmatprep.subr.mxu0 0.0
    %779 = vmatpush1.msra.mxu0 0.0
    %780 = vmatprep.subr.mxu0 0.0
    %781 = vmatpush1.msra.mxu0 0.0
    %782 = vmatprep.subr.mxu0 0.0
    %783 = vmatpush1.msra.mxu0 0.0
    %784 = vmatprep.subr.mxu0 0.0
    %785 = vmatpush1.msra.mxu0 0.0
    %786 = vmatprep.subr.mxu0 0.0
    %787 = vmatpush1.msra.mxu0 0.0
    %788 = vmatprep.subr.mxu0 0.0
    %789 = vmatpush1.msra.mxu0 0.0
    %790 = vmatprep.mubr.f32.mxu0 0.0
    %791 = vmatmul.mubr.f32.gmra.mrb[0].mxu0 %v72
    %v792 = vpop.f32.mrb[0].mxu0
    %v793 = vadd.f32 %v709, %v792
    %v794 = vpop.f32.mrb[0].mxu0
    %795 = vdwg.mxu0
    %796 = vmatprep.subr.mxu0 0.0
    %797 = vmatpush1.msra.mxu0 %v685
    %798 = vmatprep.subr.mxu0 0.0
    %799 = vmatpush1.msra.mxu0 %v686
    %800 = vmatprep.subr.mxu0 0.0
    %801 = vmatpush1.msra.mxu0 %v687
    %802 = vmatprep.subr.mxu0 0.0
    %803 = vmatpush1.msra.mxu0 %v688
    %804 = vmatprep.subr.mxu0 0.0
    %805 = vmatpush1.msra.mxu0 0.0
    %806 = vmatprep.subr.mxu0 0.0
    %807 = vmatpush1.msra.mxu0 0.0
    %808 = vmatprep.subr.mxu0 0.0
    %809 = vmatpush1.msra.mxu0 0.0
    %810 = vmatprep.subr.mxu0 0.0
    %811 = vmatpush1.msra.mxu0 0.0
    %812 = vmatprep.subr.mxu0 0.0
    %813 = vmatpush1.msra.mxu0 0.0
    %814 = vmatprep.subr.mxu0 0.0
    %815 = vmatpush1.msra.mxu0 0.0
    %816 = vmatprep.subr.mxu0 0.0
    %817 = vmatpush1.msra.mxu0 0.0
    %818 = vmatprep.subr.mxu0 0.0
    %819 = vmatpush1.msra.mxu0 0.0
    %820 = vmatprep.subr.mxu0 0.0
    %821 = vmatpush1.msra.mxu0 0.0
    %822 = vmatprep.subr.mxu0 0.0
    %823 = vmatpush1.msra.mxu0 0.0
    %824 = vmatprep.subr.mxu0 0.0
    %825 = vmatpush1.msra.mxu0 0.0
    %826 = vmatprep.subr.mxu0 0.0
    %827 = vmatpush1.msra.mxu0 0.0
    %828 = vmatprep.subr.mxu0 0.0
    %829 = vmatpush1.msra.mxu0 0.0
    %830 = vmatprep.subr.mxu0 0.0
    %831 = vmatpush1.msra.mxu0 0.0
    %832 = vmatprep.subr.mxu0 0.0
    %833 = vmatpush1.msra.mxu0 0.0
    %834 = vmatprep.subr.mxu0 0.0
    %835 = vmatpush1.msra.mxu0 0.0
    %836 = vmatprep.subr.mxu0 0.0
    %837 = vmatpush1.msra.mxu0 0.0
    %838 = vmatprep.subr.mxu0 0.0
    %839 = vmatpush1.msra.mxu0 0.0
    %840 = vmatprep.subr.mxu0 0.0
    %841 = vmatpush1.msra.mxu0 0.0
    %842 = vmatprep.subr.mxu0 0.0
    %843 = vmatpush1.msra.mxu0 0.0
    %844 = vmatprep.subr.mxu0 0.0
    %845 = vmatpush1.msra.mxu0 0.0
    %846 = vmatprep.subr.mxu0 0.0
    %847 = vmatpush1.msra.mxu0 0.0
    %848 = vmatprep.subr.mxu0 0.0
    %849 = vmatpush1.msra.mxu0 0.0
    %850 = vmatprep.subr.mxu0 0.0
    %851 = vmatpush1.msra.mxu0 0.0
    %852 = vmatprep.subr.mxu0 0.0
    %853 = vmatpush1.msra.mxu0 0.0
    %854 = vmatprep.subr.mxu0 0.0
    %855 = vmatpush1.msra.mxu0 0.0
    %856 = vmatprep.subr.mxu0 0.0
    %857 = vmatpush1.msra.mxu0 0.0
    %858 = vmatprep.subr.mxu0 0.0
    %859 = vmatpush1.msra.mxu0 0.0
    %860 = vmatprep.mubr.f32.mxu0 0.0
    %861 = vmatmul.mubr.f32.gmra.mrb[0].mxu0 %v72
    %v862 = vpop.f32.mrb[0].mxu0
    %v863 = vadd.f32 %v713, %v862
    %v864 = vpop.f32.mrb[0].mxu0
    %865 = vdwg.mxu0
    %866 = vmatprep.subr.mxu0 0.0
    %867 = vmatpush1.msra.mxu0 %v689
    %868 = vmatprep.subr.mxu0 0.0
    %869 = vmatpush1.msra.mxu0 %v690
    %870 = vmatprep.subr.mxu0 0.0
    %871 = vmatpush1.msra.mxu0 %v691
    %872 = vmatprep.subr.mxu0 0.0
    %873 = vmatpush1.msra.mxu0 %v692
    %874 = vmatprep.subr.mxu0 0.0
    %875 = vmatpush1.msra.mxu0 0.0
    %876 = vmatprep.subr.mxu0 0.0
    %877 = vmatpush1.msra.mxu0 0.0
    %878 = vmatprep.subr.mxu0 0.0
    %879 = vmatpush1.msra.mxu0 0.0
    %880 = vmatprep.subr.mxu0 0.0
    %881 = vmatpush1.msra.mxu0 0.0
    %882 = vmatprep.subr.mxu0 0.0
    %883 = vmatpush1.msra.mxu0 0.0
    %884 = vmatprep.subr.mxu0 0.0
    %885 = vmatpush1.msra.mxu0 0.0
    %886 = vmatprep.subr.mxu0 0.0
    %887 = vmatpush1.msra.mxu0 0.0
    %888 = vmatprep.subr.mxu0 0.0
    %889 = vmatpush1.msra.mxu0 0.0
    %890 = vmatprep.subr.mxu0 0.0
    %891 = vmatpush1.msra.mxu0 0.0
    %892 = vmatprep.subr.mxu0 0.0
    %893 = vmatpush1.msra.mxu0 0.0
    %894 = vmatprep.subr.mxu0 0.0
    %895 = vmatpush1.msra.mxu0 0.0
    %896 = vmatprep.subr.mxu0 0.0
    %897 = vmatpush1.msra.mxu0 0.0
    %898 = vmatprep.subr.mxu0 0.0
    %899 = vmatpush1.msra.mxu0 0.0
    %900 = vmatprep.subr.mxu0 0.0
    %901 = vmatpush1.msra.mxu0 0.0
    %902 = vmatprep.subr.mxu0 0.0
    %903 = vmatpush1.msra.mxu0 0.0
    %904 = vmatprep.subr.mxu0 0.0
    %905 = vmatpush1.msra.mxu0 0.0
    %906 = vmatprep.subr.mxu0 0.0
    %907 = vmatpush1.msra.mxu0 0.0
    %908 = vmatprep.subr.mxu0 0.0
    %909 = vmatpush1.msra.mxu0 0.0
    %910 = vmatprep.subr.mxu0 0.0
    %911 = vmatpush1.msra.mxu0 0.0
    %912 = vmatprep.subr.mxu0 0.0
    %913 = vmatpush1.msra.mxu0 0.0
    %914 = vmatprep.subr.mxu0 0.0
    %915 = vmatpush1.msra.mxu0 0.0
    %916 = vmatprep.subr.mxu0 0.0
    %917 = vmatpush1.msra.mxu0 0.0
    %918 = vmatprep.subr.mxu0 0.0
    %919 = vmatpush1.msra.mxu0 0.0
    %920 = vmatprep.subr.mxu0 0.0
    %921 = vmatpush1.msra.mxu0 0.0
    %922 = vmatprep.subr.mxu0 0.0
    %923 = vmatpush1.msra.mxu0 0.0
    %924 = vmatprep.subr.mxu0 0.0
    %925 = vmatpush1.msra.mxu0 0.0
    %926 = vmatprep.subr.mxu0 0.0
    %927 = vmatpush1.msra.mxu0 0.0
    %928 = vmatprep.subr.mxu0 0.0
    %929 = vmatpush1.msra.mxu0 0.0
    %930 = vmatprep.mubr.f32.mxu0 0.0
    %931 = vmatmul.mubr.f32.gmra.mrb[0].mxu0 %v72
    %v932 = vpop.f32.mrb[0].mxu0
    %v933 = vadd.f32 %v717, %v932
    %v934 = vpop.f32.mrb[0].mxu0
    %935 = vdwg.mxu0
    %936 = vmatprep.subr.mxu0 0.0
    %937 = vmatpush1.msra.mxu0 %v693
    %938 = vmatprep.subr.mxu0 0.0
    %939 = vmatpush1.msra.mxu0 %v694
    %940 = vmatprep.subr.mxu0 0.0
    %941 = vmatpush1.msra.mxu0 %v695
    %942 = vmatprep.subr.mxu0 0.0
    %943 = vmatpush1.msra.mxu0 %v696
    %944 = vmatprep.subr.mxu0 0.0
    %945 = vmatpush1.msra.mxu0 0.0
    %946 = vmatprep.subr.mxu0 0.0
    %947 = vmatpush1.msra.mxu0 0.0
    %948 = vmatprep.subr.mxu0 0.0
    %949 = vmatpush1.msra.mxu0 0.0
    %950 = vmatprep.subr.mxu0 0.0
    %951 = vmatpush1.msra.mxu0 0.0
    %952 = vmatprep.subr.mxu0 0.0
    %953 = vmatpush1.msra.mxu0 0.0
    %954 = vmatprep.subr.mxu0 0.0
    %955 = vmatpush1.msra.mxu0 0.0
    %956 = vmatprep.subr.mxu0 0.0
    %957 = vmatpush1.msra.mxu0 0.0
    %958 = vmatprep.subr.mxu0 0.0
    %959 = vmatpush1.msra.mxu0 0.0
    %960 = vmatprep.subr.mxu0 0.0
    %961 = vmatpush1.msra.mxu0 0.0
    %962 = vmatprep.subr.mxu0 0.0
    %963 = vmatpush1.msra.mxu0 0.0
    %964 = vmatprep.subr.mxu0 0.0
    %965 = vmatpush1.msra.mxu0 0.0
    %966 = vmatprep.subr.mxu0 0.0
    %967 = vmatpush1.msra.mxu0 0.0
    %968 = vmatprep.subr.mxu0 0.0
    %969 = vmatpush1.msra.mxu0 0.0
    %970 = vmatprep.subr.mxu0 0.0
    %971 = vmatpush1.msra.mxu0 0.0
    %972 = vmatprep.subr.mxu0 0.0
    %973 = vmatpush1.msra.mxu0 0.0
    %974 = vmatprep.subr.mxu0 0.0
    %975 = vmatpush1.msra.mxu0 0.0
    %976 = vmatprep.subr.mxu0 0.0
    %977 = vmatpush1.msra.mxu0 0.0
    %978 = vmatprep.subr.mxu0 0.0
    %979 = vmatpush1.msra.mxu0 0.0
    %980 = vmatprep.subr.mxu0 0.0
    %981 = vmatpush1.msra.mxu0 0.0
    %982 = vmatprep.subr.mxu0 0.0
    %983 = vmatpush1.msra.mxu0 0.0
    %984 = vmatprep.subr.mxu0 0.0
    %985 = vmatpush1.msra.mxu0 0.0
    %986 = vmatprep.subr.mxu0 0.0
    %987 = vmatpush1.msra.mxu0 0.0
    %988 = vmatprep.subr.mxu0 0.0
    %989 = vmatpush1.msra.mxu0 0.0
    %990 = vmatprep.subr.mxu0 0.0
    %991 = vmatpush1.msra.mxu0 0.0
    %992 = vmatprep.subr.mxu0 0.0
    %993 = vmatpush1.msra.mxu0 0.0
    %994 = vmatprep.subr.mxu0 0.0
    %995 = vmatpush1.msra.mxu0 0.0
    %996 = vmatprep.subr.mxu0 0.0
    %997 = vmatpush1.msra.mxu0 0.0
    %998 = vmatprep.subr.mxu0 0.0
    %999 = vmatpush1.msra.mxu0 0.0
    %1000 = vmatprep.mubr.f32.mxu0 0.0
    %1001 = vmatmul.mubr.f32.gmra.mrb[0].mxu0 %v72
    %v1002 = vpop.f32.mrb[0].mxu0
    %v1003 = vadd.f32 %v721, %v1002
    %v1004 = vpop.f32.mrb[0].mxu0
    %1005 = vdwg.mxu0
    %vm1006 = vcmp.gt.f32.partialorder %v25, 0.0
    %v1007 = vsel %vm1006, 0.0, -1e+30
    %vm1008 = vcmask 64512
    %v1010 = vsel %vm1008, %v793, 0
    %v1013 = vsel %vm1008, %v141, 0
    %1015 = vmatprep.subr.mxu0 0.0
    %1016 = vmatpush1.xpose.msra.mxu0 %v1013
    %1017 = vmatprep.subr.mxu0 0.0
    %1018 = vmatpush1.xpose.msra.mxu0 0.0
    %1019 = vmatprep.subr.mxu0 0.0
    %1020 = vmatpush1.xpose.msra.mxu0 0.0
    %1021 = vmatprep.subr.mxu0 0.0
    %1022 = vmatpush1.xpose.msra.mxu0 0.0
    %1023 = vmatprep.subr.mxu0 0.0
    %1024 = vmatpush1.xpose.msra.mxu0 0.0
    %1025 = vmatprep.subr.mxu0 0.0
    %1026 = vmatpush1.xpose.msra.mxu0 0.0
    %1027 = vmatprep.subr.mxu0 0.0
    %1028 = vmatpush1.xpose.msra.mxu0 0.0
    %1029 = vmatprep.subr.mxu0 0.0
    %1030 = vmatpush1.xpose.msra.mxu0 0.0
    %1031 = vmatprep.subr.mxu0 0.0
    %1032 = vmatpush1.xpose.msra.mxu0 0.0
    %1033 = vmatprep.subr.mxu0 0.0
    %1034 = vmatpush1.xpose.msra.mxu0 0.0
    %1035 = vmatprep.subr.mxu0 0.0
    %1036 = vmatpush1.xpose.msra.mxu0 0.0
    %1037 = vmatprep.subr.mxu0 0.0
    %1038 = vmatpush1.xpose.msra.mxu0 0.0
    %1039 = vmatprep.subr.mxu0 0.0
    %1040 = vmatpush1.xpose.msra.mxu0 0.0
    %1041 = vmatprep.subr.mxu0 0.0
    %1042 = vmatpush1.xpose.msra.mxu0 0.0
    %1043 = vmatprep.subr.mxu0 0.0
    %1044 = vmatpush1.xpose.msra.mxu0 0.0
    %1045 = vmatprep.subr.mxu0 0.0
    %1046 = vmatpush1.xpose.msra.mxu0 0.0
    %1047 = vmatprep.subr.mxu0 0.0
    %1048 = vmatpush1.xpose.msra.mxu0 0.0
    %1049 = vmatprep.subr.mxu0 0.0
    %1050 = vmatpush1.xpose.msra.mxu0 0.0
    %1051 = vmatprep.subr.mxu0 0.0
    %1052 = vmatpush1.xpose.msra.mxu0 0.0
    %1053 = vmatprep.subr.mxu0 0.0
    %1054 = vmatpush1.xpose.msra.mxu0 0.0
    %1055 = vmatprep.subr.mxu0 0.0
    %1056 = vmatpush1.xpose.msra.mxu0 0.0
    %1057 = vmatprep.subr.mxu0 0.0
    %1058 = vmatpush1.xpose.msra.mxu0 0.0
    %1059 = vmatprep.subr.mxu0 0.0
    %1060 = vmatpush1.xpose.msra.mxu0 0.0
    %1061 = vmatprep.subr.mxu0 0.0
    %1062 = vmatpush1.xpose.msra.mxu0 0.0
    %1063 = vmatprep.subr.mxu0 0.0
    %1064 = vmatpush1.xpose.msra.mxu0 0.0
    %1065 = vmatprep.subr.mxu0 0.0
    %1066 = vmatpush1.xpose.msra.mxu0 0.0
    %1067 = vmatprep.subr.mxu0 0.0
    %1068 = vmatpush1.xpose.msra.mxu0 0.0
    %1069 = vmatprep.subr.mxu0 0.0
    %1070 = vmatpush1.xpose.msra.mxu0 0.0
    %1071 = vmatprep.subr.mxu0 0.0
    %1072 = vmatpush1.xpose.msra.mxu0 0.0
    %1073 = vmatprep.subr.mxu0 0.0
    %1074 = vmatpush1.xpose.msra.mxu0 0.0
    %1075 = vmatprep.subr.mxu0 0.0
    %1076 = vmatpush1.xpose.msra.mxu0 0.0
    %1077 = vmatprep.subr.mxu0 0.0
    %1078 = vmatpush1.xpose.msra.mxu0 0.0
    %1079 = vmatprep.mubr.f32.mxu0 0.0
    %1080 = vmatmul.mubr.f32.gmra.mrb[0].mxu0 %v1010
    %v1081 = vpop.f32.mrb[0].mxu0
    %v1082 = vadd.f32 0.0, %v1081
    %v1083 = vpop.f32.mrb[0].mxu0
    %1084 = vdwg.mxu0
    %v1086 = vsel %vm1008, %v863, 0
    %v1089 = vsel %vm1008, %v211, 0
    %1091 = vmatprep.subr.mxu0 0.0
    %1092 = vmatpush1.xpose.msra.mxu0 %v1089
    %1093 = vmatprep.subr.mxu0 0.0
    %1094 = vmatpush1.xpose.msra.mxu0 0.0
    %1095 = vmatprep.subr.mxu0 0.0
    %1096 = vmatpush1.xpose.msra.mxu0 0.0
    %1097 = vmatprep.subr.mxu0 0.0
    %1098 = vmatpush1.xpose.msra.mxu0 0.0
    %1099 = vmatprep.subr.mxu0 0.0
    %1100 = vmatpush1.xpose.msra.mxu0 0.0
    %1101 = vmatprep.subr.mxu0 0.0
    %1102 = vmatpush1.xpose.msra.mxu0 0.0
    %1103 = vmatprep.subr.mxu0 0.0
    %1104 = vmatpush1.xpose.msra.mxu0 0.0
    %1105 = vmatprep.subr.mxu0 0.0
    %1106 = vmatpush1.xpose.msra.mxu0 0.0
    %1107 = vmatprep.subr.mxu0 0.0
    %1108 = vmatpush1.xpose.msra.mxu0 0.0
    %1109 = vmatprep.subr.mxu0 0.0
    %1110 = vmatpush1.xpose.msra.mxu0 0.0
    %1111 = vmatprep.subr.mxu0 0.0
    %1112 = vmatpush1.xpose.msra.mxu0 0.0
    %1113 = vmatprep.subr.mxu0 0.0
    %1114 = vmatpush1.xpose.msra.mxu0 0.0
    %1115 = vmatprep.subr.mxu0 0.0
    %1116 = vmatpush1.xpose.msra.mxu0 0.0
    %1117 = vmatprep.subr.mxu0 0.0
    %1118 = vmatpush1.xpose.msra.mxu0 0.0
    %1119 = vmatprep.subr.mxu0 0.0
    %1120 = vmatpush1.xpose.msra.mxu0 0.0
    %1121 = vmatprep.subr.mxu0 0.0
    %1122 = vmatpush1.xpose.msra.mxu0 0.0
    %1123 = vmatprep.subr.mxu0 0.0
    %1124 = vmatpush1.xpose.msra.mxu0 0.0
    %1125 = vmatprep.subr.mxu0 0.0
    %1126 = vmatpush1.xpose.msra.mxu0 0.0
    %1127 = vmatprep.subr.mxu0 0.0
    %1128 = vmatpush1.xpose.msra.mxu0 0.0
    %1129 = vmatprep.subr.mxu0 0.0
    %1130 = vmatpush1.xpose.msra.mxu0 0.0
    %1131 = vmatprep.subr.mxu0 0.0
    %1132 = vmatpush1.xpose.msra.mxu0 0.0
    %1133 = vmatprep.subr.mxu0 0.0
    %1134 = vmatpush1.xpose.msra.mxu0 0.0
    %1135 = vmatprep.subr.mxu0 0.0
    %1136 = vmatpush1.xpose.msra.mxu0 0.0
    %1137 = vmatprep.subr.mxu0 0.0
    %1138 = vmatpush1.xpose.msra.mxu0 0.0
    %1139 = vmatprep.subr.mxu0 0.0
    %1140 = vmatpush1.xpose.msra.mxu0 0.0
    %1141 = vmatprep.subr.mxu0 0.0
    %1142 = vmatpush1.xpose.msra.mxu0 0.0
    %1143 = vmatprep.subr.mxu0 0.0
    %1144 = vmatpush1.xpose.msra.mxu0 0.0
    %1145 = vmatprep.subr.mxu0 0.0
    %1146 = vmatpush1.xpose.msra.mxu0 0.0
    %1147 = vmatprep.subr.mxu0 0.0
    %1148 = vmatpush1.xpose.msra.mxu0 0.0
    %1149 = vmatprep.subr.mxu0 0.0
    %1150 = vmatpush1.xpose.msra.mxu0 0.0
    %1151 = vmatprep.subr.mxu0 0.0
    %1152 = vmatpush1.xpose.msra.mxu0 0.0
    %1153 = vmatprep.subr.mxu0 0.0
    %1154 = vmatpush1.xpose.msra.mxu0 0.0
    %1155 = vmatprep.mubr.f32.mxu0 0.0
    %1156 = vmatmul.mubr.f32.gmra.mrb[0].mxu0 %v1086
    %v1157 = vpop.f32.mrb[0].mxu0
    %v1158 = vadd.f32 0.0, %v1157
    %v1159 = vpop.f32.mrb[0].mxu0
    %1160 = vdwg.mxu0
    %v1162 = vsel %vm1008, %v933, 0
    %v1165 = vsel %vm1008, %v281, 0
    %1167 = vmatprep.subr.mxu0 0.0
    %1168 = vmatpush1.xpose.msra.mxu0 %v1165
    %1169 = vmatprep.subr.mxu0 0.0
    %1170 = vmatpush1.xpose.msra.mxu0 0.0
    %1171 = vmatprep.subr.mxu0 0.0
    %1172 = vmatpush1.xpose.msra.mxu0 0.0
    %1173 = vmatprep.subr.mxu0 0.0
    %1174 = vmatpush1.xpose.msra.mxu0 0.0
    %1175 = vmatprep.subr.mxu0 0.0
    %1176 = vmatpush1.xpose.msra.mxu0 0.0
    %1177 = vmatprep.subr.mxu0 0.0
    %1178 = vmatpush1.xpose.msra.mxu0 0.0
    %1179 = vmatprep.subr.mxu0 0.0
    %1180 = vmatpush1.xpose.msra.mxu0 0.0
    %1181 = vmatprep.subr.mxu0 0.0
    %1182 = vmatpush1.xpose.msra.mxu0 0.0
    %1183 = vmatprep.subr.mxu0 0.0
    %1184 = vmatpush1.xpose.msra.mxu0 0.0
    %1185 = vmatprep.subr.mxu0 0.0
    %1186 = vmatpush1.xpose.msra.mxu0 0.0
    %1187 = vmatprep.subr.mxu0 0.0
    %1188 = vmatpush1.xpose.msra.mxu0 0.0
    %1189 = vmatprep.subr.mxu0 0.0
    %1190 = vmatpush1.xpose.msra.mxu0 0.0
    %1191 = vmatprep.subr.mxu0 0.0
    %1192 = vmatpush1.xpose.msra.mxu0 0.0
    %1193 = vmatprep.subr.mxu0 0.0
    %1194 = vmatpush1.xpose.msra.mxu0 0.0
    %1195 = vmatprep.subr.mxu0 0.0
    %1196 = vmatpush1.xpose.msra.mxu0 0.0
    %1197 = vmatprep.subr.mxu0 0.0
    %1198 = vmatpush1.xpose.msra.mxu0 0.0
    %1199 = vmatprep.subr.mxu0 0.0
    %1200 = vmatpush1.xpose.msra.mxu0 0.0
    %1201 = vmatprep.subr.mxu0 0.0
    %1202 = vmatpush1.xpose.msra.mxu0 0.0
    %1203 = vmatprep.subr.mxu0 0.0
    %1204 = vmatpush1.xpose.msra.mxu0 0.0
    %1205 = vmatprep.subr.mxu0 0.0
    %1206 = vmatpush1.xpose.msra.mxu0 0.0
    %1207 = vmatprep.subr.mxu0 0.0
    %1208 = vmatpush1.xpose.msra.mxu0 0.0
    %1209 = vmatprep.subr.mxu0 0.0
    %1210 = vmatpush1.xpose.msra.mxu0 0.0
    %1211 = vmatprep.subr.mxu0 0.0
    %1212 = vmatpush1.xpose.msra.mxu0 0.0
    %1213 = vmatprep.subr.mxu0 0.0
    %1214 = vmatpush1.xpose.msra.mxu0 0.0
    %1215 = vmatprep.subr.mxu0 0.0
    %1216 = vmatpush1.xpose.msra.mxu0 0.0
    %1217 = vmatprep.subr.mxu0 0.0
    %1218 = vmatpush1.xpose.msra.mxu0 0.0
    %1219 = vmatprep.subr.mxu0 0.0
    %1220 = vmatpush1.xpose.msra.mxu0 0.0
    %1221 = vmatprep.subr.mxu0 0.0
    %1222 = vmatpush1.xpose.msra.mxu0 0.0
    %1223 = vmatprep.subr.mxu0 0.0
    %1224 = vmatpush1.xpose.msra.mxu0 0.0
    %1225 = vmatprep.subr.mxu0 0.0
    %1226 = vmatpush1.xpose.msra.mxu0 0.0
    %1227 = vmatprep.subr.mxu0 0.0
    %1228 = vmatpush1.xpose.msra.mxu0 0.0
    %1229 = vmatprep.subr.mxu0 0.0
    %1230 = vmatpush1.xpose.msra.mxu0 0.0
    %1231 = vmatprep.mubr.f32.mxu0 0.0
    %1232 = vmatmul.mubr.f32.gmra.mrb[0].mxu0 %v1162
    %v1233 = vpop.f32.mrb[0].mxu0
    %v1234 = vadd.f32 0.0, %v1233
    %v1235 = vpop.f32.mrb[0].mxu0
    %1236 = vdwg.mxu0
    %v1238 = vsel %vm1008, %v1003, 0
    %v1241 = vsel %vm1008, %v351, 0
    %1243 = vmatprep.subr.mxu0 0.0
    %1244 = vmatpush1.xpose.msra.mxu0 %v1241
    %1245 = vmatprep.subr.mxu0 0.0
    %1246 = vmatpush1.xpose.msra.mxu0 0.0
    %1247 = vmatprep.subr.mxu0 0.0
    %1248 = vmatpush1.xpose.msra.mxu0 0.0
    %1249 = vmatprep.subr.mxu0 0.0
    %1250 = vmatpush1.xpose.msra.mxu0 0.0
    %1251 = vmatprep.subr.mxu0 0.0
    %1252 = vmatpush1.xpose.msra.mxu0 0.0
    %1253 = vmatprep.subr.mxu0 0.0
    %1254 = vmatpush1.xpose.msra.mxu0 0.0
    %1255 = vmatprep.subr.mxu0 0.0
    %1256 = vmatpush1.xpose.msra.mxu0 0.0
    %1257 = vmatprep.subr.mxu0 0.0
    %1258 = vmatpush1.xpose.msra.mxu0 0.0
    %1259 = vmatprep.subr.mxu0 0.0
    %1260 = vmatpush1.xpose.msra.mxu0 0.0
    %1261 = vmatprep.subr.mxu0 0.0
    %1262 = vmatpush1.xpose.msra.mxu0 0.0
    %1263 = vmatprep.subr.mxu0 0.0
    %1264 = vmatpush1.xpose.msra.mxu0 0.0
    %1265 = vmatprep.subr.mxu0 0.0
    %1266 = vmatpush1.xpose.msra.mxu0 0.0
    %1267 = vmatprep.subr.mxu0 0.0
    %1268 = vmatpush1.xpose.msra.mxu0 0.0
    %1269 = vmatprep.subr.mxu0 0.0
    %1270 = vmatpush1.xpose.msra.mxu0 0.0
    %1271 = vmatprep.subr.mxu0 0.0
    %1272 = vmatpush1.xpose.msra.mxu0 0.0
    %1273 = vmatprep.subr.mxu0 0.0
    %1274 = vmatpush1.xpose.msra.mxu0 0.0
    %1275 = vmatprep.subr.mxu0 0.0
    %1276 = vmatpush1.xpose.msra.mxu0 0.0
    %1277 = vmatprep.subr.mxu0 0.0
    %1278 = vmatpush1.xpose.msra.mxu0 0.0
    %1279 = vmatprep.subr.mxu0 0.0
    %1280 = vmatpush1.xpose.msra.mxu0 0.0
    %1281 = vmatprep.subr.mxu0 0.0
    %1282 = vmatpush1.xpose.msra.mxu0 0.0
    %1283 = vmatprep.subr.mxu0 0.0
    %1284 = vmatpush1.xpose.msra.mxu0 0.0
    %1285 = vmatprep.subr.mxu0 0.0
    %1286 = vmatpush1.xpose.msra.mxu0 0.0
    %1287 = vmatprep.subr.mxu0 0.0
    %1288 = vmatpush1.xpose.msra.mxu0 0.0
    %1289 = vmatprep.subr.mxu0 0.0
    %1290 = vmatpush1.xpose.msra.mxu0 0.0
    %1291 = vmatprep.subr.mxu0 0.0
    %1292 = vmatpush1.xpose.msra.mxu0 0.0
    %1293 = vmatprep.subr.mxu0 0.0
    %1294 = vmatpush1.xpose.msra.mxu0 0.0
    %1295 = vmatprep.subr.mxu0 0.0
    %1296 = vmatpush1.xpose.msra.mxu0 0.0
    %1297 = vmatprep.subr.mxu0 0.0
    %1298 = vmatpush1.xpose.msra.mxu0 0.0
    %1299 = vmatprep.subr.mxu0 0.0
    %1300 = vmatpush1.xpose.msra.mxu0 0.0
    %1301 = vmatprep.subr.mxu0 0.0
    %1302 = vmatpush1.xpose.msra.mxu0 0.0
    %1303 = vmatprep.subr.mxu0 0.0
    %1304 = vmatpush1.xpose.msra.mxu0 0.0
    %1305 = vmatprep.subr.mxu0 0.0
    %1306 = vmatpush1.xpose.msra.mxu0 0.0
    %1307 = vmatprep.mubr.f32.mxu0 0.0
    %1308 = vmatmul.mubr.f32.gmra.mrb[0].mxu0 %v1238
    %v1309 = vpop.f32.mrb[0].mxu0
    %v1310 = vadd.f32 0.0, %v1309
    %v1311 = vpop.f32.mrb[0].mxu0
    %1312 = vdwg.mxu0
    %v1313 = vmul.f32 %v1082, 0.35355338
    %v1314 = vmul.f32 %v1158, 0.35355338
    %v1315 = vmul.f32 %v1234, 0.35355338
    %v1316 = vmul.f32 %v1310, 0.35355338
    %v1317 = vadd.f32 %v1313, %v1007
    %v1318 = vadd.f32 %v1314, %v1007
    %v1319 = vadd.f32 %v1315, %v1007
    %v1320 = vadd.f32 %v1316, %v1007
    %v1321 = vsel %vm1008, %v1317, -inf
    %1322 = vmax.xlane.f32.xlu0 %v1321
    %v1323 = vpop.xlane.xlu0 %1322
    %v1324 = vsel %vm1008, %v1318, -inf
    %1325 = vmax.xlane.f32.xlu0 %v1324
    %v1326 = vpop.xlane.xlu0 %1325
    %v1327 = vsel %vm1008, %v1319, -inf
    %1328 = vmax.xlane.f32.xlu0 %v1327
    %v1329 = vpop.xlane.xlu0 %1328
    %v1330 = vsel %vm1008, %v1320, -inf
    %1331 = vmax.xlane.f32.xlu0 %v1330
    %v1332 = vpop.xlane.xlu0 %1331
    %v1333 = vsub.f32 %v1317, %v1323
    %v1334 = vsub.f32 %v1318, %v1326
    %v1335 = vsub.f32 %v1319, %v1329
    %v1336 = vsub.f32 %v1320, %v1332
    %v1337 = vmul.f32 %v1333, 1.442695
    %v1338 = vpow.pop %v1337
    %v1339 = vmul.f32 %v1334, 1.442695
    %v1340 = vpow.pop %v1339
    %v1341 = vmul.f32 %v1335, 1.442695
    %v1342 = vpow.pop %v1341
    %v1343 = vmul.f32 %v1336, 1.442695
    %v1344 = vpow.pop %v1343
    %v1345 = vsel %vm1008, %v1338, 0.0
    %1346 = vadd.xlane.f32.xlu0 %v1345
    %v1347 = vpop.xlane.xlu0 %1346
    %v1348 = vsel %vm1008, %v1340, 0.0
    %1349 = vadd.xlane.f32.xlu0 %v1348
    %v1350 = vpop.xlane.xlu0 %1349
    %v1351 = vsel %vm1008, %v1342, 0.0
    %1352 = vadd.xlane.f32.xlu0 %v1351
    %v1353 = vpop.xlane.xlu0 %1352
    %v1354 = vsel %vm1008, %v1344, 0.0
    %1355 = vadd.xlane.f32.xlu0 %v1354
    %v1356 = vpop.xlane.xlu0 %1355
    %v1357 = vrcp.pop %v1347
    %v1358 = vrcp.pop %v1350
    %v1359 = vrcp.pop %v1353
    %v1360 = vrcp.pop %v1356
    %v1361 = vmul.f32 %v1338, %v1357
    %v1362 = vmul.f32 %v1340, %v1358
    %v1363 = vmul.f32 %v1342, %v1359
    %v1364 = vmul.f32 %v1344, %v1360
    %v1366 = vsel %vm1008, %v1361, 0
    %1368 = vmatprep.subr.mxu0 0.0
    %1369 = vmatpush1.msra.mxu0 %v467
    %1370 = vmatprep.subr.mxu0 0.0
    %1371 = vmatpush1.msra.mxu0 0.0
    %1372 = vmatprep.subr.mxu0 0.0
    %1373 = vmatpush1.msra.mxu0 0.0
    %1374 = vmatprep.subr.mxu0 0.0
    %1375 = vmatpush1.msra.mxu0 0.0
    %1376 = vmatprep.subr.mxu0 0.0
    %1377 = vmatpush1.msra.mxu0 0.0
    %1378 = vmatprep.subr.mxu0 0.0
    %1379 = vmatpush1.msra.mxu0 0.0
    %1380 = vmatprep.subr.mxu0 0.0
    %1381 = vmatpush1.msra.mxu0 0.0
    %1382 = vmatprep.subr.mxu0 0.0
    %1383 = vmatpush1.msra.mxu0 0.0
    %1384 = vmatprep.subr.mxu0 0.0
    %1385 = vmatpush1.msra.mxu0 0.0
    %1386 = vmatprep.subr.mxu0 0.0
    %1387 = vmatpush1.msra.mxu0 0.0
    %1388 = vmatprep.subr.mxu0 0.0
    %1389 = vmatpush1.msra.mxu0 0.0
    %1390 = vmatprep.subr.mxu0 0.0
    %1391 = vmatpush1.msra.mxu0 0.0
    %1392 = vmatprep.subr.mxu0 0.0
    %1393 = vmatpush1.msra.mxu0 0.0
    %1394 = vmatprep.subr.mxu0 0.0
    %1395 = vmatpush1.msra.mxu0 0.0
    %1396 = vmatprep.subr.mxu0 0.0
    %1397 = vmatpush1.msra.mxu0 0.0
    %1398 = vmatprep.subr.mxu0 0.0
    %1399 = vmatpush1.msra.mxu0 0.0
    %1400 = vmatprep.subr.mxu0 0.0
    %1401 = vmatpush1.msra.mxu0 0.0
    %1402 = vmatprep.subr.mxu0 0.0
    %1403 = vmatpush1.msra.mxu0 0.0
    %1404 = vmatprep.subr.mxu0 0.0
    %1405 = vmatpush1.msra.mxu0 0.0
    %1406 = vmatprep.subr.mxu0 0.0
    %1407 = vmatpush1.msra.mxu0 0.0
    %1408 = vmatprep.subr.mxu0 0.0
    %1409 = vmatpush1.msra.mxu0 0.0
    %1410 = vmatprep.subr.mxu0 0.0
    %1411 = vmatpush1.msra.mxu0 0.0
    %1412 = vmatprep.subr.mxu0 0.0
    %1413 = vmatpush1.msra.mxu0 0.0
    %1414 = vmatprep.subr.mxu0 0.0
    %1415 = vmatpush1.msra.mxu0 0.0
    %1416 = vmatprep.subr.mxu0 0.0
    %1417 = vmatpush1.msra.mxu0 0.0
    %1418 = vmatprep.subr.mxu0 0.0
    %1419 = vmatpush1.msra.mxu0 0.0
    %1420 = vmatprep.subr.mxu0 0.0
    %1421 = vmatpush1.msra.mxu0 0.0
    %1422 = vmatprep.subr.mxu0 0.0
    %1423 = vmatpush1.msra.mxu0 0.0
    %1424 = vmatprep.subr.mxu0 0.0
    %1425 = vmatpush1.msra.mxu0 0.0
    %1426 = vmatprep.subr.mxu0 0.0
    %1427 = vmatpush1.msra.mxu0 0.0
    %1428 = vmatprep.subr.mxu0 0.0
    %1429 = vmatpush1.msra.mxu0 0.0
    %1430 = vmatprep.subr.mxu0 0.0
    %1431 = vmatpush1.msra.mxu0 0.0
    %1432 = vmatprep.mubr.f32.mxu0 0.0
    %1433 = vmatmul.mubr.f32.gmra.mrb[0].mxu0 %v1366
    %v1434 = vpop.f32.mrb[0].mxu0
    %v1435 = vadd.f32 0.0, %v1434
    %v1436 = vpop.f32.mrb[0].mxu0
    %1437 = vdwg.mxu0
    %v1439 = vsel %vm1008, %v1362, 0
    %1441 = vmatprep.subr.mxu0 0.0
    %1442 = vmatpush1.msra.mxu0 %v537
    %1443 = vmatprep.subr.mxu0 0.0
    %1444 = vmatpush1.msra.mxu0 0.0
    %1445 = vmatprep.subr.mxu0 0.0
    %1446 = vmatpush1.msra.mxu0 0.0
    %1447 = vmatprep.subr.mxu0 0.0
    %1448 = vmatpush1.msra.mxu0 0.0
    %1449 = vmatprep.subr.mxu0 0.0
    %1450 = vmatpush1.msra.mxu0 0.0
    %1451 = vmatprep.subr.mxu0 0.0
    %1452 = vmatpush1.msra.mxu0 0.0
    %1453 = vmatprep.subr.mxu0 0.0
    %1454 = vmatpush1.msra.mxu0 0.0
    %1455 = vmatprep.subr.mxu0 0.0
    %1456 = vmatpush1.msra.mxu0 0.0
    %1457 = vmatprep.subr.mxu0 0.0
    %1458 = vmatpush1.msra.mxu0 0.0
    %1459 = vmatprep.subr.mxu0 0.0
    %1460 = vmatpush1.msra.mxu0 0.0
    %1461 = vmatprep.subr.mxu0 0.0
    %1462 = vmatpush1.msra.mxu0 0.0
    %1463 = vmatprep.subr.mxu0 0.0
    %1464 = vmatpush1.msra.mxu0 0.0
    %1465 = vmatprep.subr.mxu0 0.0
    %1466 = vmatpush1.msra.mxu0 0.0
    %1467 = vmatprep.subr.mxu0 0.0
    %1468 = vmatpush1.msra.mxu0 0.0
    %1469 = vmatprep.subr.mxu0 0.0
    %1470 = vmatpush1.msra.mxu0 0.0
    %1471 = vmatprep.subr.mxu0 0.0
    %1472 = vmatpush1.msra.mxu0 0.0
    %1473 = vmatprep.subr.mxu0 0.0
    %1474 = vmatpush1.msra.mxu0 0.0
    %1475 = vmatprep.subr.mxu0 0.0
    %1476 = vmatpush1.msra.mxu0 0.0
    %1477 = vmatprep.subr.mxu0 0.0
    %1478 = vmatpush1.msra.mxu0 0.0
    %1479 = vmatprep.subr.mxu0 0.0
    %1480 = vmatpush1.msra.mxu0 0.0
    %1481 = vmatprep.subr.mxu0 0.0
    %1482 = vmatpush1.msra.mxu0 0.0
    %1483 = vmatprep.subr.mxu0 0.0
    %1484 = vmatpush1.msra.mxu0 0.0
    %1485 = vmatprep.subr.mxu0 0.0
    %1486 = vmatpush1.msra.mxu0 0.0
    %1487 = vmatprep.subr.mxu0 0.0
    %1488 = vmatpush1.msra.mxu0 0.0
    %1489 = vmatprep.subr.mxu0 0.0
    %1490 = vmatpush1.msra.mxu0 0.0
    %1491 = vmatprep.subr.mxu0 0.0
    %1492 = vmatpush1.msra.mxu0 0.0
    %1493 = vmatprep.subr.mxu0 0.0
    %1494 = vmatpush1.msra.mxu0 0.0
    %1495 = vmatprep.subr.mxu0 0.0
    %1496 = vmatpush1.msra.mxu0 0.0
    %1497 = vmatprep.subr.mxu0 0.0
    %1498 = vmatpush1.msra.mxu0 0.0
    %1499 = vmatprep.subr.mxu0 0.0
    %1500 = vmatpush1.msra.mxu0 0.0
    %1501 = vmatprep.subr.mxu0 0.0
    %1502 = vmatpush1.msra.mxu0 0.0
    %1503 = vmatprep.subr.mxu0 0.0
    %1504 = vmatpush1.msra.mxu0 0.0
    %1505 = vmatprep.mubr.f32.mxu0 0.0
    %1506 = vmatmul.mubr.f32.gmra.mrb[0].mxu0 %v1439
    %v1507 = vpop.f32.mrb[0].mxu0
    %v1508 = vadd.f32 0.0, %v1507
    %v1509 = vpop.f32.mrb[0].mxu0
    %1510 = vdwg.mxu0
    %v1512 = vsel %vm1008, %v1363, 0
    %1514 = vmatprep.subr.mxu0 0.0
    %1515 = vmatpush1.msra.mxu0 %v607
    %1516 = vmatprep.subr.mxu0 0.0
    %1517 = vmatpush1.msra.mxu0 0.0
    %1518 = vmatprep.subr.mxu0 0.0
    %1519 = vmatpush1.msra.mxu0 0.0
    %1520 = vmatprep.subr.mxu0 0.0
    %1521 = vmatpush1.msra.mxu0 0.0
    %1522 = vmatprep.subr.mxu0 0.0
    %1523 = vmatpush1.msra.mxu0 0.0
    %1524 = vmatprep.subr.mxu0 0.0
    %1525 = vmatpush1.msra.mxu0 0.0
    %1526 = vmatprep.subr.mxu0 0.0
    %1527 = vmatpush1.msra.mxu0 0.0
    %1528 = vmatprep.subr.mxu0 0.0
    %1529 = vmatpush1.msra.mxu0 0.0
    %1530 = vmatprep.subr.mxu0 0.0
    %1531 = vmatpush1.msra.mxu0 0.0
    %1532 = vmatprep.subr.mxu0 0.0
    %1533 = vmatpush1.msra.mxu0 0.0
    %1534 = vmatprep.subr.mxu0 0.0
    %1535 = vmatpush1.msra.mxu0 0.0
    %1536 = vmatprep.subr.mxu0 0.0
    %1537 = vmatpush1.msra.mxu0 0.0
    %1538 = vmatprep.subr.mxu0 0.0
    %1539 = vmatpush1.msra.mxu0 0.0
    %1540 = vmatprep.subr.mxu0 0.0
    %1541 = vmatpush1.msra.mxu0 0.0
    %1542 = vmatprep.subr.mxu0 0.0
    %1543 = vmatpush1.msra.mxu0 0.0
    %1544 = vmatprep.subr.mxu0 0.0
    %1545 = vmatpush1.msra.mxu0 0.0
    %1546 = vmatprep.subr.mxu0 0.0
    %1547 = vmatpush1.msra.mxu0 0.0
    %1548 = vmatprep.subr.mxu0 0.0
    %1549 = vmatpush1.msra.mxu0 0.0
    %1550 = vmatprep.subr.mxu0 0.0
    %1551 = vmatpush1.msra.mxu0 0.0
    %1552 = vmatprep.subr.mxu0 0.0
    %1553 = vmatpush1.msra.mxu0 0.0
    %1554 = vmatprep.subr.mxu0 0.0
    %1555 = vmatpush1.msra.mxu0 0.0
    %1556 = vmatprep.subr.mxu0 0.0
    %1557 = vmatpush1.msra.mxu0 0.0
    %1558 = vmatprep.subr.mxu0 0.0
    %1559 = vmatpush1.msra.mxu0 0.0
    %1560 = vmatprep.subr.mxu0 0.0
    %1561 = vmatpush1.msra.mxu0 0.0
    %1562 = vmatprep.subr.mxu0 0.0
    %1563 = vmatpush1.msra.mxu0 0.0
    %1564 = vmatprep.subr.mxu0 0.0
    %1565 = vmatpush1.msra.mxu0 0.0
    %1566 = vmatprep.subr.mxu0 0.0
    %1567 = vmatpush1.msra.mxu0 0.0
    %1568 = vmatprep.subr.mxu0 0.0
    %1569 = vmatpush1.msra.mxu0 0.0
    %1570 = vmatprep.subr.mxu0 0.0
    %1571 = vmatpush1.msra.mxu0 0.0
    %1572 = vmatprep.subr.mxu0 0.0
    %1573 = vmatpush1.msra.mxu0 0.0
    %1574 = vmatprep.subr.mxu0 0.0
    %1575 = vmatpush1.msra.mxu0 0.0
    %1576 = vmatprep.subr.mxu0 0.0
    %1577 = vmatpush1.msra.mxu0 0.0
    %1578 = vmatprep.mubr.f32.mxu0 0.0
    %1579 = vmatmul.mubr.f32.gmra.mrb[0].mxu0 %v1512
    %v1580 = vpop.f32.mrb[0].mxu0
    %v1581 = vadd.f32 0.0, %v1580
    %v1582 = vpop.f32.mrb[0].mxu0
    %1583 = vdwg.mxu0
    %v1585 = vsel %vm1008, %v1364, 0
    %1587 = vmatprep.subr.mxu0 0.0
    %1588 = vmatpush1.msra.mxu0 %v677
    %1589 = vmatprep.subr.mxu0 0.0
    %1590 = vmatpush1.msra.mxu0 0.0
    %1591 = vmatprep.subr.mxu0 0.0
    %1592 = vmatpush1.msra.mxu0 0.0
    %1593 = vmatprep.subr.mxu0 0.0
    %1594 = vmatpush1.msra.mxu0 0.0
    %1595 = vmatprep.subr.mxu0 0.0
    %1596 = vmatpush1.msra.mxu0 0.0
    %1597 = vmatprep.subr.mxu0 0.0
    %1598 = vmatpush1.msra.mxu0 0.0
    %1599 = vmatprep.subr.mxu0 0.0
    %1600 = vmatpush1.msra.mxu0 0.0
    %1601 = vmatprep.subr.mxu0 0.0
    %1602 = vmatpush1.msra.mxu0 0.0
    %1603 = vmatprep.subr.mxu0 0.0
    %1604 = vmatpush1.msra.mxu0 0.0
    %1605 = vmatprep.subr.mxu0 0.0
    %1606 = vmatpush1.msra.mxu0 0.0
    %1607 = vmatprep.subr.mxu0 0.0
    %1608 = vmatpush1.msra.mxu0 0.0
    %1609 = vmatprep.subr.mxu0 0.0
    %1610 = vmatpush1.msra.mxu0 0.0
    %1611 = vmatprep.subr.mxu0 0.0
    %1612 = vmatpush1.msra.mxu0 0.0
    %1613 = vmatprep.subr.mxu0 0.0
    %1614 = vmatpush1.msra.mxu0 0.0
    %1615 = vmatprep.subr.mxu0 0.0
    %1616 = vmatpush1.msra.mxu0 0.0
    %1617 = vmatprep.subr.mxu0 0.0
    %1618 = vmatpush1.msra.mxu0 0.0
    %1619 = vmatprep.subr.mxu0 0.0
    %1620 = vmatpush1.msra.mxu0 0.0
    %1621 = vmatprep.subr.mxu0 0.0
    %1622 = vmatpush1.msra.mxu0 0.0
    %1623 = vmatprep.subr.mxu0 0.0
    %1624 = vmatpush1.msra.mxu0 0.0
    %1625 = vmatprep.subr.mxu0 0.0
    %1626 = vmatpush1.msra.mxu0 0.0
    %1627 = vmatprep.subr.mxu0 0.0
    %1628 = vmatpush1.msra.mxu0 0.0
    %1629 = vmatprep.subr.mxu0 0.0
    %1630 = vmatpush1.msra.mxu0 0.0
    %1631 = vmatprep.subr.mxu0 0.0
    %1632 = vmatpush1.msra.mxu0 0.0
    %1633 = vmatprep.subr.mxu0 0.0
    %1634 = vmatpush1.msra.mxu0 0.0
    %1635 = vmatprep.subr.mxu0 0.0
    %1636 = vmatpush1.msra.mxu0 0.0
    %1637 = vmatprep.subr.mxu0 0.0
    %1638 = vmatpush1.msra.mxu0 0.0
    %1639 = vmatprep.subr.mxu0 0.0
    %1640 = vmatpush1.msra.mxu0 0.0
    %1641 = vmatprep.subr.mxu0 0.0
    %1642 = vmatpush1.msra.mxu0 0.0
    %1643 = vmatprep.subr.mxu0 0.0
    %1644 = vmatpush1.msra.mxu0 0.0
    %1645 = vmatprep.subr.mxu0 0.0
    %1646 = vmatpush1.msra.mxu0 0.0
    %1647 = vmatprep.subr.mxu0 0.0
    %1648 = vmatpush1.msra.mxu0 0.0
    %1649 = vmatprep.subr.mxu0 0.0
    %1650 = vmatpush1.msra.mxu0 0.0
    %1651 = vmatprep.mubr.f32.mxu0 0.0
    %1652 = vmatmul.mubr.f32.gmra.mrb[0].mxu0 %v1585
    %v1653 = vpop.f32.mrb[0].mxu0
    %v1654 = vadd.f32 0.0, %v1653
    %v1655 = vpop.f32.mrb[0].mxu0
    %1656 = vdwg.mxu0
    %v1657 = vld [vmem:[%s4] sm:$0xff]
    %v1658 = vld [vmem:[%s4 + $0x8] sm:$0xff]
    %v1659 = vld [vmem:[%s4 + $0x10] sm:$0xff]
    %v1660 = vld [vmem:[%s4 + $0x18] sm:$0xff]
    %v1662 = vsel %vm1008, %v1435, 0
    %1664 = vmatprep.subr.mxu0 0.0
    %1665 = vmatpush1.msra.mxu0 %v1657
    %1666 = vmatprep.subr.mxu0 0.0
    %1667 = vmatpush1.msra.mxu0 0.0
    %1668 = vmatprep.subr.mxu0 0.0
    %1669 = vmatpush1.msra.mxu0 0.0
    %1670 = vmatprep.subr.mxu0 0.0
    %1671 = vmatpush1.msra.mxu0 0.0
    %1672 = vmatprep.subr.mxu0 0.0
    %1673 = vmatpush1.msra.mxu0 0.0
    %1674 = vmatprep.subr.mxu0 0.0
    %1675 = vmatpush1.msra.mxu0 0.0
    %1676 = vmatprep.subr.mxu0 0.0
    %1677 = vmatpush1.msra.mxu0 0.0
    %1678 = vmatprep.subr.mxu0 0.0
    %1679 = vmatpush1.msra.mxu0 0.0
    %1680 = vmatprep.subr.mxu0 0.0
    %1681 = vmatpush1.msra.mxu0 0.0
    %1682 = vmatprep.subr.mxu0 0.0
    %1683 = vmatpush1.msra.mxu0 0.0
    %1684 = vmatprep.subr.mxu0 0.0
    %1685 = vmatpush1.msra.mxu0 0.0
    %1686 = vmatprep.subr.mxu0 0.0
    %1687 = vmatpush1.msra.mxu0 0.0
    %1688 = vmatprep.subr.mxu0 0.0
    %1689 = vmatpush1.msra.mxu0 0.0
    %1690 = vmatprep.subr.mxu0 0.0
    %1691 = vmatpush1.msra.mxu0 0.0
    %1692 = vmatprep.subr.mxu0 0.0
    %1693 = vmatpush1.msra.mxu0 0.0
    %1694 = vmatprep.subr.mxu0 0.0
    %1695 = vmatpush1.msra.mxu0 0.0
    %1696 = vmatprep.subr.mxu0 0.0
    %1697 = vmatpush1.msra.mxu0 0.0
    %1698 = vmatprep.subr.mxu0 0.0
    %1699 = vmatpush1.msra.mxu0 0.0
    %1700 = vmatprep.subr.mxu0 0.0
    %1701 = vmatpush1.msra.mxu0 0.0
    %1702 = vmatprep.subr.mxu0 0.0
    %1703 = vmatpush1.msra.mxu0 0.0
    %1704 = vmatprep.subr.mxu0 0.0
    %1705 = vmatpush1.msra.mxu0 0.0
    %1706 = vmatprep.subr.mxu0 0.0
    %1707 = vmatpush1.msra.mxu0 0.0
    %1708 = vmatprep.subr.mxu0 0.0
    %1709 = vmatpush1.msra.mxu0 0.0
    %1710 = vmatprep.subr.mxu0 0.0
    %1711 = vmatpush1.msra.mxu0 0.0
    %1712 = vmatprep.subr.mxu0 0.0
    %1713 = vmatpush1.msra.mxu0 0.0
    %1714 = vmatprep.subr.mxu0 0.0
    %1715 = vmatpush1.msra.mxu0 0.0
    %1716 = vmatprep.subr.mxu0 0.0
    %1717 = vmatpush1.msra.mxu0 0.0
    %1718 = vmatprep.subr.mxu0 0.0
    %1719 = vmatpush1.msra.mxu0 0.0
    %1720 = vmatprep.subr.mxu0 0.0
    %1721 = vmatpush1.msra.mxu0 0.0
    %1722 = vmatprep.subr.mxu0 0.0
    %1723 = vmatpush1.msra.mxu0 0.0
    %1724 = vmatprep.subr.mxu0 0.0
    %1725 = vmatpush1.msra.mxu0 0.0
    %1726 = vmatprep.subr.mxu0 0.0
    %1727 = vmatpush1.msra.mxu0 0.0
    %1728 = vmatprep.mubr.f32.mxu0 0.0
    %1729 = vmatmul.mubr.f32.gmra.mrb[0].mxu0 %v1662
    %v1730 = vpop.f32.mrb[0].mxu0
    %v1731 = vadd.f32 0.0, %v1730
    %v1732 = vpop.f32.mrb[0].mxu0
    %1733 = vdwg.mxu0
    %v1735 = vsel %vm1008, %v1508, 0
    %1737 = vmatprep.subr.mxu0 0.0
    %1738 = vmatpush1.msra.mxu0 %v1658
    %1739 = vmatprep.subr.mxu0 0.0
    %1740 = vmatpush1.msra.mxu0 0.0
    %1741 = vmatprep.subr.mxu0 0.0
    %1742 = vmatpush1.msra.mxu0 0.0
    %1743 = vmatprep.subr.mxu0 0.0
    %1744 = vmatpush1.msra.mxu0 0.0
    %1745 = vmatprep.subr.mxu0 0.0
    %1746 = vmatpush1.msra.mxu0 0.0
    %1747 = vmatprep.subr.mxu0 0.0
    %1748 = vmatpush1.msra.mxu0 0.0
    %1749 = vmatprep.subr.mxu0 0.0
    %1750 = vmatpush1.msra.mxu0 0.0
    %1751 = vmatprep.subr.mxu0 0.0
    %1752 = vmatpush1.msra.mxu0 0.0
    %1753 = vmatprep.subr.mxu0 0.0
    %1754 = vmatpush1.msra.mxu0 0.0
    %1755 = vmatprep.subr.mxu0 0.0
    %1756 = vmatpush1.msra.mxu0 0.0
    %1757 = vmatprep.subr.mxu0 0.0
    %1758 = vmatpush1.msra.mxu0 0.0
    %1759 = vmatprep.subr.mxu0 0.0
    %1760 = vmatpush1.msra.mxu0 0.0
    %1761 = vmatprep.subr.mxu0 0.0
    %1762 = vmatpush1.msra.mxu0 0.0
    %1763 = vmatprep.subr.mxu0 0.0
    %1764 = vmatpush1.msra.mxu0 0.0
    %1765 = vmatprep.subr.mxu0 0.0
    %1766 = vmatpush1.msra.mxu0 0.0
    %1767 = vmatprep.subr.mxu0 0.0
    %1768 = vmatpush1.msra.mxu0 0.0
    %1769 = vmatprep.subr.mxu0 0.0
    %1770 = vmatpush1.msra.mxu0 0.0
    %1771 = vmatprep.subr.mxu0 0.0
    %1772 = vmatpush1.msra.mxu0 0.0
    %1773 = vmatprep.subr.mxu0 0.0
    %1774 = vmatpush1.msra.mxu0 0.0
    %1775 = vmatprep.subr.mxu0 0.0
    %1776 = vmatpush1.msra.mxu0 0.0
    %1777 = vmatprep.subr.mxu0 0.0
    %1778 = vmatpush1.msra.mxu0 0.0
    %1779 = vmatprep.subr.mxu0 0.0
    %1780 = vmatpush1.msra.mxu0 0.0
    %1781 = vmatprep.subr.mxu0 0.0
    %1782 = vmatpush1.msra.mxu0 0.0
    %1783 = vmatprep.subr.mxu0 0.0
    %1784 = vmatpush1.msra.mxu0 0.0
    %1785 = vmatprep.subr.mxu0 0.0
    %1786 = vmatpush1.msra.mxu0 0.0
    %1787 = vmatprep.subr.mxu0 0.0
    %1788 = vmatpush1.msra.mxu0 0.0
    %1789 = vmatprep.subr.mxu0 0.0
    %1790 = vmatpush1.msra.mxu0 0.0
    %1791 = vmatprep.subr.mxu0 0.0
    %1792 = vmatpush1.msra.mxu0 0.0
    %1793 = vmatprep.subr.mxu0 0.0
    %1794 = vmatpush1.msra.mxu0 0.0
    %1795 = vmatprep.subr.mxu0 0.0
    %1796 = vmatpush1.msra.mxu0 0.0
    %1797 = vmatprep.subr.mxu0 0.0
    %1798 = vmatpush1.msra.mxu0 0.0
    %1799 = vmatprep.subr.mxu0 0.0
    %1800 = vmatpush1.msra.mxu0 0.0
    %1801 = vmatprep.mubr.f32.mxu0 0.0
    %1802 = vmatmul.mubr.f32.gmra.mrb[0].mxu0 %v1735
    %v1803 = vpop.f32.mrb[0].mxu0
    %v1804 = vadd.f32 0.0, %v1803
    %v1805 = vpop.f32.mrb[0].mxu0
    %1806 = vdwg.mxu0
    %v1808 = vsel %vm1008, %v1581, 0
    %1810 = vmatprep.subr.mxu0 0.0
    %1811 = vmatpush1.msra.mxu0 %v1659
    %1812 = vmatprep.subr.mxu0 0.0
    %1813 = vmatpush1.msra.mxu0 0.0
    %1814 = vmatprep.subr.mxu0 0.0
    %1815 = vmatpush1.msra.mxu0 0.0
    %1816 = vmatprep.subr.mxu0 0.0
    %1817 = vmatpush1.msra.mxu0 0.0
    %1818 = vmatprep.subr.mxu0 0.0
    %1819 = vmatpush1.msra.mxu0 0.0
    %1820 = vmatprep.subr.mxu0 0.0
    %1821 = vmatpush1.msra.mxu0 0.0
    %1822 = vmatprep.subr.mxu0 0.0
    %1823 = vmatpush1.msra.mxu0 0.0
    %1824 = vmatprep.subr.mxu0 0.0
    %1825 = vmatpush1.msra.mxu0 0.0
    %1826 = vmatprep.subr.mxu0 0.0
    %1827 = vmatpush1.msra.mxu0 0.0
    %1828 = vmatprep.subr.mxu0 0.0
    %1829 = vmatpush1.msra.mxu0 0.0
    %1830 = vmatprep.subr.mxu0 0.0
    %1831 = vmatpush1.msra.mxu0 0.0
    %1832 = vmatprep.subr.mxu0 0.0
    %1833 = vmatpush1.msra.mxu0 0.0
    %1834 = vmatprep.subr.mxu0 0.0
    %1835 = vmatpush1.msra.mxu0 0.0
    %1836 = vmatprep.subr.mxu0 0.0
    %1837 = vmatpush1.msra.mxu0 0.0
    %1838 = vmatprep.subr.mxu0 0.0
    %1839 = vmatpush1.msra.mxu0 0.0
    %1840 = vmatprep.subr.mxu0 0.0
    %1841 = vmatpush1.msra.mxu0 0.0
    %1842 = vmatprep.subr.mxu0 0.0
    %1843 = vmatpush1.msra.mxu0 0.0
    %1844 = vmatprep.subr.mxu0 0.0
    %1845 = vmatpush1.msra.mxu0 0.0
    %1846 = vmatprep.subr.mxu0 0.0
    %1847 = vmatpush1.msra.mxu0 0.0
    %1848 = vmatprep.subr.mxu0 0.0
    %1849 = vmatpush1.msra.mxu0 0.0
    %1850 = vmatprep.subr.mxu0 0.0
    %1851 = vmatpush1.msra.mxu0 0.0
    %1852 = vmatprep.subr.mxu0 0.0
    %1853 = vmatpush1.msra.mxu0 0.0
    %1854 = vmatprep.subr.mxu0 0.0
    %1855 = vmatpush1.msra.mxu0 0.0
    %1856 = vmatprep.subr.mxu0 0.0
    %1857 = vmatpush1.msra.mxu0 0.0
    %1858 = vmatprep.subr.mxu0 0.0
    %1859 = vmatpush1.msra.mxu0 0.0
    %1860 = vmatprep.subr.mxu0 0.0
    %1861 = vmatpush1.msra.mxu0 0.0
    %1862 = vmatprep.subr.mxu0 0.0
    %1863 = vmatpush1.msra.mxu0 0.0
    %1864 = vmatprep.subr.mxu0 0.0
    %1865 = vmatpush1.msra.mxu0 0.0
    %1866 = vmatprep.subr.mxu0 0.0
    %1867 = vmatpush1.msra.mxu0 0.0
    %1868 = vmatprep.subr.mxu0 0.0
    %1869 = vmatpush1.msra.mxu0 0.0
    %1870 = vmatprep.subr.mxu0 0.0
    %1871 = vmatpush1.msra.mxu0 0.0
    %1872 = vmatprep.subr.mxu0 0.0
    %1873 = vmatpush1.msra.mxu0 0.0
    %1874 = vmatprep.mubr.f32.mxu0 0.0
    %1875 = vmatmul.mubr.f32.gmra.mrb[0].mxu0 %v1808
    %v1876 = vpop.f32.mrb[0].mxu0
    %v1877 = vadd.f32 0.0, %v1876
    %v1878 = vpop.f32.mrb[0].mxu0
    %1879 = vdwg.mxu0
    %v1881 = vsel %vm1008, %v1654, 0
    %1883 = vmatprep.subr.mxu0 0.0
    %1884 = vmatpush1.msra.mxu0 %v1660
    %1885 = vmatprep.subr.mxu0 0.0
    %1886 = vmatpush1.msra.mxu0 0.0
    %1887 = vmatprep.subr.mxu0 0.0
    %1888 = vmatpush1.msra.mxu0 0.0
    %1889 = vmatprep.subr.mxu0 0.0
    %1890 = vmatpush1.msra.mxu0 0.0
    %1891 = vmatprep.subr.mxu0 0.0
    %1892 = vmatpush1.msra.mxu0 0.0
    %1893 = vmatprep.subr.mxu0 0.0
    %1894 = vmatpush1.msra.mxu0 0.0
    %1895 = vmatprep.subr.mxu0 0.0
    %1896 = vmatpush1.msra.mxu0 0.0
    %1897 = vmatprep.subr.mxu0 0.0
    %1898 = vmatpush1.msra.mxu0 0.0
    %1899 = vmatprep.subr.mxu0 0.0
    %1900 = vmatpush1.msra.mxu0 0.0
    %1901 = vmatprep.subr.mxu0 0.0
    %1902 = vmatpush1.msra.mxu0 0.0
    %1903 = vmatprep.subr.mxu0 0.0
    %1904 = vmatpush1.msra.mxu0 0.0
    %1905 = vmatprep.subr.mxu0 0.0
    %1906 = vmatpush1.msra.mxu0 0.0
    %1907 = vmatprep.subr.mxu0 0.0
    %1908 = vmatpush1.msra.mxu0 0.0
    %1909 = vmatprep.subr.mxu0 0.0
    %1910 = vmatpush1.msra.mxu0 0.0
    %1911 = vmatprep.subr.mxu0 0.0
    %1912 = vmatpush1.msra.mxu0 0.0
    %1913 = vmatprep.subr.mxu0 0.0
    %1914 = vmatpush1.msra.mxu0 0.0
    %1915 = vmatprep.subr.mxu0 0.0
    %1916 = vmatpush1.msra.mxu0 0.0
    %1917 = vmatprep.subr.mxu0 0.0
    %1918 = vmatpush1.msra.mxu0 0.0
    %1919 = vmatprep.subr.mxu0 0.0
    %1920 = vmatpush1.msra.mxu0 0.0
    %1921 = vmatprep.subr.mxu0 0.0
    %1922 = vmatpush1.msra.mxu0 0.0
    %1923 = vmatprep.subr.mxu0 0.0
    %1924 = vmatpush1.msra.mxu0 0.0
    %1925 = vmatprep.subr.mxu0 0.0
    %1926 = vmatpush1.msra.mxu0 0.0
    %1927 = vmatprep.subr.mxu0 0.0
    %1928 = vmatpush1.msra.mxu0 0.0
    %1929 = vmatprep.subr.mxu0 0.0
    %1930 = vmatpush1.msra.mxu0 0.0
    %1931 = vmatprep.subr.mxu0 0.0
    %1932 = vmatpush1.msra.mxu0 0.0
    %1933 = vmatprep.subr.mxu0 0.0
    %1934 = vmatpush1.msra.mxu0 0.0
    %1935 = vmatprep.subr.mxu0 0.0
    %1936 = vmatpush1.msra.mxu0 0.0
    %1937 = vmatprep.subr.mxu0 0.0
    %1938 = vmatpush1.msra.mxu0 0.0
    %1939 = vmatprep.subr.mxu0 0.0
    %1940 = vmatpush1.msra.mxu0 0.0
    %1941 = vmatprep.subr.mxu0 0.0
    %1942 = vmatpush1.msra.mxu0 0.0
    %1943 = vmatprep.subr.mxu0 0.0
    %1944 = vmatpush1.msra.mxu0 0.0
    %1945 = vmatprep.subr.mxu0 0.0
    %1946 = vmatpush1.msra.mxu0 0.0
    %1947 = vmatprep.mubr.f32.mxu0 0.0
    %1948 = vmatmul.mubr.f32.gmra.mrb[0].mxu0 %v1881
    %v1949 = vpop.f32.mrb[0].mxu0
    %v1950 = vadd.f32 0.0, %v1949
    %v1951 = vpop.f32.mrb[0].mxu0
    %1952 = vdwg.mxu0
    %v1953 = vsel %vm70, %v1731, 0.0
    %v1954 = vsel %vm70, %v1804, 0.0
    %v1955 = vadd.f32 %v1953, %v1954
    %v1956 = vsel %vm70, %v1877, 0.0
    %v1957 = vadd.f32 %v1955, %v1956
    %v1958 = vsel %vm70, %v1950, 0.0
    %v1959 = vadd.f32 %v1957, %v1958
    %v1960 = vsel %vm1008, %v25, 0.0
    %1961 = vadd.xlane.f32.xlu0 %v1960
    %v1962 = vpop.xlane.xlu0 %1961
    %vm1963 = vcmp.gt.f32.partialorder %v1962, 0.0
    %v1964 = vsel %vm1963, 1, 0
    %vm1965 = vcmp.eq.s32.totalorder %v1964, 1
    %v1966 = vsel %vm1965, %v1959, 0.0
    %v1967 = vld [vmem:[%s5] sm:$0x1]
    %v1969 = vlaneseq
    %v1970 = vshrl.u32 %v1969, 7
    %v1971 = vsub.s32 0, %v1970
    %v1972 = vrot.slane %v1967, %v1971
    %v1974 = vadd.f32 %v1966, %v1972
    %1975 = vst.msk [vmem:[#allocation2] sm:$0xff] %vm70, %v1974
    // Predicated region
    $region26: #{hgt_forward.1} parent=1 // pred_check
      _
    $region27: #{hgt_forward.1} parent=1 // pred_check_branch
      %1977 = sbr.rel (0) target = $region29
    $region28: #{hgt_forward.1} parent=1 // pred_region
      %s1979 = ssub.s32 128, 128
      %1980 = vsyncadd [#allocation3], %s1979
      %s1982 = sshll.u32 [#allocation2], 4
      %s1983 = int_to_ptr.vmem [resolvable:$true] %s1982
      %1985 = dma.vmem_to_hbm [thread:$0]  %s1983, 128, %s6, [#allocation3]
    $region29: #{hgt_forward.1} parent=1 // pred_fallthru
      _
    // Predicated region
    $region30: #{hgt_forward.1} parent=1 // pred_check
      _
    $region31: #{hgt_forward.1} parent=1 // pred_check_branch
      %1987 = sbr.rel (0) target = $region33
    $region32: #{hgt_forward.1} parent=1 // pred_region
      %1988 = dma.done [#allocation3], 128
    $region33: #{hgt_forward.1} parent=1 // pred_fallthru
      _
    %1989 = vsyncpa [#allocation3], 1

</llo_original>
